<compile_context>
chip_gen: v6e
topology: v6e:2x2x1
jax: 0.10.0
libtpu: 0.0.40
codegen_flags: <defaults>
</compile_context>

<pallas_src>
import functools
import math

import jax
import jax.numpy as jnp
import numpy as np
from jax import lax
from jax.experimental import pallas as pl
from jax.experimental.pallas import tpu as pltpu


def _attn_kernel(qkv_ref, bias_ref, o_ref, *, b_blk, n_heads, attn_ch, scale):
    # qkv_ref:  (B_blk, n_ctx, 3*n_heads*attn_ch) VMEM tile.
    # bias_ref: (B_blk, 1, n_ctx) f32 additive key bias (0 = valid, -inf = pad).
    # o_ref:    (B_blk, n_ctx, n_heads*attn_ch) lane-dense output tile.
    scale2 = scale * scale                 # = 1/sqrt(attn_ch), folded onto q
    dn = (((1,), (1,)), ((), ()))          # contract trailing dims of both sides

    for b in range(b_blk):                 # static unroll over batch rows in block
        bias = bias_ref[b]                 # (1, n_ctx); broadcasts over queries
        for h in range(n_heads):           # static unroll over heads
            base = h * 3 * attn_ch
            q = qkv_ref[b, :, base:base + attn_ch]                    # (n_ctx, c)
            k = qkv_ref[b, :, base + attn_ch:base + 2 * attn_ch]      # (n_ctx, c)
            v = qkv_ref[b, :, base + 2 * attn_ch:base + 3 * attn_ch]  # (n_ctx, c)

            # bf16 MXU operands, f32 accumulation.
            qb = (q * scale2).astype(jnp.bfloat16)
            kb = k.astype(jnp.bfloat16)
            w = lax.dot_general(qb, kb, dn,
                                preferred_element_type=jnp.float32)   # (n_ctx, n_ctx)
            w = w + bias                                              # key padding

            # softmax over keys in f32 (matches `.float()` softmax in reference).
            # NOTE: fully-padded key rows give NaN (inf - inf), same as the
            # PyTorch masked_fill(-inf) reference.
            w_max = jnp.max(w, axis=-1, keepdims=True)
            e = jnp.exp(w - w_max)
            denom = jnp.sum(e, axis=-1, keepdims=True)
            p = e * pl.reciprocal(denom, approx=True)

            out_h = jnp.dot(p.astype(jnp.bfloat16), v.astype(jnp.bfloat16),
                            preferred_element_type=jnp.float32)       # (n_ctx, c)

            # Store this head's slice immediately: retires its registers and
            # keeps only one (n_ctx, n_ctx) f32 score matrix live at a time.
            o_ref[b, :, h * attn_ch:(h + 1) * attn_ch] = out_h.astype(o_ref.dtype)


def _choose_batch_block(bs, n_ctx, width, out_width, itemsize):
    """Pick batch rows per grid step from a VMEM budget; keep >=2 grid steps."""
    # Double-buffered input/output/bias tiles per batch row.
    per_row = 2 * (n_ctx * width * itemsize
                   + n_ctx * out_width * itemsize
                   + n_ctx * 4)
    # One live f32 score matrix + one head's f32 q/k/v/out working set.
    work = n_ctx * n_ctx * 4 + 4 * n_ctx * max(width // 3, 1) * 4
    budget = 8 * 1024 * 1024  # ~8 MiB: fits v5e's 16 MiB scoped default w/ headroom
    b_blk = max(1, min(bs, (budget - work) // max(per_row, 1)))
    if bs >= 2:
        # Keep at least 2 steps on the parallel axis (v7x megacore sharding).
        b_blk = min(b_blk, bs // 2)
    b_blk = max(int(b_blk), 1)
    while bs % b_blk:          # require an exact tiling of the batch
        b_blk -= 1
    return max(b_blk, 1)


def qkv_multihead_attention(qkv, n_heads, key_padding_mask=None):
    """Pallas equivalent of QKVMultiheadAttention.forward.

    qkv:               (bs, n_ctx, width), width = 3 * n_heads * attn_ch,
                       per-head lane layout [q_h | k_h | v_h]
    key_padding_mask:  optional (bs, n_ctx) bool, True = padded key
    returns:           (bs, n_ctx, n_heads * attn_ch)
    """
    bs, n_ctx, width = qkv.shape
    attn_ch = width // n_heads // 3
    out_width = n_heads * attn_ch
    scale = 1.0 / math.sqrt(math.sqrt(attn_ch))

    # Additive float bias (0 for valid keys, -inf for padded keys).
    if key_padding_mask is None:
        bias = jnp.zeros((bs, 1, n_ctx), dtype=jnp.float32)
    else:
        bias = jnp.where(key_padding_mask, -jnp.inf, 0.0).astype(
            jnp.float32).reshape(bs, 1, n_ctx)

    b_blk = _choose_batch_block(bs, n_ctx, width, out_width, qkv.dtype.itemsize)
    grid = (bs // b_blk,)

    kernel = functools.partial(_attn_kernel, b_blk=b_blk, n_heads=n_heads,
                               attn_ch=attn_ch, scale=scale)

    return pl.pallas_call(
        kernel,
        out_shape=jax.ShapeDtypeStruct((bs, n_ctx, out_width), qkv.dtype),
        grid=grid,
        in_specs=[
            pl.BlockSpec((b_blk, n_ctx, width), lambda b: (b, 0, 0)),
            pl.BlockSpec((b_blk, 1, n_ctx), lambda b: (b, 0, 0)),
        ],
        out_specs=pl.BlockSpec((b_blk, n_ctx, out_width), lambda b: (b, 0, 0)),
        compiler_params=pltpu.CompilerParams(
            dimension_semantics=("parallel",),
            vmem_limit_bytes=32 * 1024 * 1024),
    )(qkv, bias)


def _reference(qkv, n_heads, key_padding_mask=None):
    """Pure-JAX transcription of the PyTorch forward for verification."""
    bs, n_ctx, width = qkv.shape
    attn_ch = width // n_heads // 3
    scale = 1.0 / math.sqrt(math.sqrt(attn_ch))
    qkv4 = qkv.reshape(bs, n_ctx, n_heads, 3 * attn_ch)
    q, k, v = (qkv4[..., i * attn_ch:(i + 1) * attn_ch] for i in range(3))
    w = jnp.einsum('bthc,bshc->bhts', q * scale, k * scale)
    if key_padding_mask is not None:
        w = jnp.where(key_padding_mask[:, None, None, :], -jnp.inf, w)
    w = jax.nn.softmax(w.astype(jnp.float32), axis=-1).astype(w.dtype)
    return jnp.einsum('bhts,bshc->bthc', w, v).reshape(bs, n_ctx, -1)


if __name__ == "__main__":
    # Small shapes consistent with the module: bs=4, n_ctx=16, n_heads=4, attn_ch=8.
    # (bs=4 exercises the batch-blocking path: B_blk=2, grid=(2,).)
    bs, n_ctx, n_heads, attn_ch = 4, 16, 4, 8
    width = 3 * n_heads * attn_ch  # 96

    key = jax.random.PRNGKey(0)
    k_qkv, _ = jax.random.split(key)
    qkv = jax.random.normal(k_qkv, (bs, n_ctx, width), dtype=jnp.float32)
    # Deterministic padding mask: last 3 keys of batch 1 and last key of
    # batch 3 are padding (no fully-padded rows).
    key_padding_mask = jnp.zeros((bs, n_ctx), dtype=jnp.bool_)
    key_padding_mask = key_padding_mask.at[1, -3:].set(True)
    key_padding_mask = key_padding_mask.at[3, -1:].set(True)

    out = qkv_multihead_attention(qkv, n_heads, key_padding_mask)
    out = jax.block_until_ready(out)

    ref = _reference(qkv, n_heads, key_padding_mask)
    # Tolerance accounts for bf16 MXU operands (vs. the reference's f32
    # einsums) and the EUP approximate reciprocal in the softmax denominator;
    # structural errors would be O(1) and still be caught.
    np.testing.assert_allclose(np.asarray(out), np.asarray(ref),
                               rtol=5e-2, atol=5e-2)
    print("KERNEL_OK")
</pallas_src>

<mosaic_0001>
module attributes {stable_mosaic.version = 11 : i64} {
  func.func @_attn_kernel(%arg0: i32, %arg1: memref<2x16x96xf32, #tpu.memory_space<vmem>>, %arg2: memref<2x1x16xf32, #tpu.memory_space<vmem>>, %arg3: memref<2x16x32xf32, #tpu.memory_space<vmem>>) attributes {dimension_semantics = [#tpu.dimension_semantics<parallel>], iteration_bounds = array<i64: 2>, scalar_prefetch = 0 : i64, scratch_operands = 0 : i64, tpu.core_type = #tpu.core_type<tc>, window_params = [{transform_indices = @transform_0, window_bounds = array<i64: 2, 16, 96>}, {transform_indices = @transform_1, window_bounds = array<i64: 2, 1, 16>}, {transform_indices = @transform_2, window_bounds = array<i64: 2, 16, 32>}]} {
    %c0 = arith.constant 0 : index
    %c0_0 = arith.constant 0 : index
    %c0_1 = arith.constant 0 : index
    %0 = vector.load %arg2[%c0, %c0_0, %c0_1] : memref<2x1x16xf32, #tpu.memory_space<vmem>>, vector<1x1x16xf32>
    %1 = vector.shape_cast %0 : vector<1x1x16xf32> to vector<1x16xf32>
    %c0_2 = arith.constant 0 : index
    %c0_3 = arith.constant 0 : index
    %c0_4 = arith.constant 0 : index
    %2 = vector.load %arg1[%c0_2, %c0_3, %c0_4] : memref<2x16x96xf32, #tpu.memory_space<vmem>>, vector<1x16x8xf32>
    %3 = vector.shape_cast %2 : vector<1x16x8xf32> to vector<16x8xf32>
    %c0_5 = arith.constant 0 : index
    %c0_6 = arith.constant 0 : index
    %c8 = arith.constant 8 : index
    %4 = vector.load %arg1[%c0_5, %c0_6, %c8] : memref<2x16x96xf32, #tpu.memory_space<vmem>>, vector<1x16x8xf32>
    %5 = vector.shape_cast %4 : vector<1x16x8xf32> to vector<16x8xf32>
    %c0_7 = arith.constant 0 : index
    %c0_8 = arith.constant 0 : index
    %c16 = arith.constant 16 : index
    %6 = vector.load %arg1[%c0_7, %c0_8, %c16] : memref<2x16x96xf32, #tpu.memory_space<vmem>>, vector<1x16x8xf32>
    %7 = vector.shape_cast %6 : vector<1x16x8xf32> to vector<16x8xf32>
    %cst = arith.constant 0.353553385 : f32
    %8 = vector.broadcast %cst : f32 to vector<16x8xf32>
    %9 = arith.mulf %3, %8 : vector<16x8xf32>
    %10 = arith.truncf %9 : vector<16x8xf32> to vector<16x8xbf16>
    %11 = arith.truncf %5 : vector<16x8xf32> to vector<16x8xbf16>
    %cst_9 = arith.constant dense<0.000000e+00> : vector<16x16xf32>
    %12 = tpu.matmul %10, %11, %cst_9 {dimension_numbers = #tpu.dot_dimension_numbers<[1], [1], [0], [0], [0, 0, 1, 0], [], []>} : vector<16x8xbf16>, vector<16x8xbf16>, vector<16x16xf32> -> vector<16x16xf32>
    %13 = vector.broadcast %1 : vector<1x16xf32> to vector<16x16xf32>
    %14 = arith.addf %12, %13 : vector<16x16xf32>
    %cst_10 = arith.constant dense<0xFF800000> : vector<16xf32>
    %15 = vector.multi_reduction <maximumf>, %14, %cst_10 [1] : vector<16x16xf32> to vector<16xf32>
    %16 = vector.shape_cast %15 : vector<16xf32> to vector<16x1xf32>
    %17 = vector.broadcast %16 : vector<16x1xf32> to vector<16x16xf32>
    %18 = arith.subf %14, %17 : vector<16x16xf32>
    %19 = math.exp %18 : vector<16x16xf32>
    %cst_11 = arith.constant dense<0.000000e+00> : vector<16xf32>
    %20 = vector.multi_reduction <add>, %19, %cst_11 [1] : vector<16x16xf32> to vector<16xf32>
    %21 = vector.shape_cast %20 : vector<16xf32> to vector<16x1xf32>
    %22 = tpu.reciprocal %21 {approx = true} : vector<16x1xf32> -> vector<16x1xf32>
    %23 = vector.broadcast %22 : vector<16x1xf32> to vector<16x16xf32>
    %24 = arith.mulf %19, %23 : vector<16x16xf32>
    %25 = arith.truncf %24 : vector<16x16xf32> to vector<16x16xbf16>
    %26 = arith.truncf %7 : vector<16x8xf32> to vector<16x8xbf16>
    %cst_12 = arith.constant dense<0.000000e+00> : vector<16x8xf32>
    %27 = tpu.matmul %25, %26, %cst_12 {dimension_numbers = #tpu.dot_dimension_numbers<[1], [0], [0], [1], [0, 0, 1, 1], [], []>} : vector<16x16xbf16>, vector<16x8xbf16>, vector<16x8xf32> -> vector<16x8xf32>
    %c0_13 = arith.constant 0 : index
    %c0_14 = arith.constant 0 : index
    %c0_15 = arith.constant 0 : index
    %28 = vector.load %arg3[%c0_13, %c0_14, %c0_15] : memref<2x16x32xf32, #tpu.memory_space<vmem>>, vector<1x16x8xf32>
    %29 = vector.shape_cast %28 : vector<1x16x8xf32> to vector<16x8xf32>
    %30 = vector.shape_cast %27 : vector<16x8xf32> to vector<1x16x8xf32>
    tpu.vector_store %arg3[%c0_13, %c0_14, %c0_15], %30 {strides = array<i32>} : memref<2x16x32xf32, #tpu.memory_space<vmem>>, vector<1x16x8xf32>,
    %c0_16 = arith.constant 0 : index
    %c0_17 = arith.constant 0 : index
    %c24 = arith.constant 24 : index
    %31 = vector.load %arg1[%c0_16, %c0_17, %c24] : memref<2x16x96xf32, #tpu.memory_space<vmem>>, vector<1x16x8xf32>
    %32 = vector.shape_cast %31 : vector<1x16x8xf32> to vector<16x8xf32>
    %c0_18 = arith.constant 0 : index
    %c0_19 = arith.constant 0 : index
    %c32 = arith.constant 32 : index
    %33 = vector.load %arg1[%c0_18, %c0_19, %c32] : memref<2x16x96xf32, #tpu.memory_space<vmem>>, vector<1x16x8xf32>
    %34 = vector.shape_cast %33 : vector<1x16x8xf32> to vector<16x8xf32>
    %c0_20 = arith.constant 0 : index
    %c0_21 = arith.constant 0 : index
    %c40 = arith.constant 40 : index
    %35 = vector.load %arg1[%c0_20, %c0_21, %c40] : memref<2x16x96xf32, #tpu.memory_space<vmem>>, vector<1x16x8xf32>
    %36 = vector.shape_cast %35 : vector<1x16x8xf32> to vector<16x8xf32>
    %cst_22 = arith.constant 0.353553385 : f32
    %37 = vector.broadcast %cst_22 : f32 to vector<16x8xf32>
    %38 = arith.mulf %32, %37 : vector<16x8xf32>
    %39 = arith.truncf %38 : vector<16x8xf32> to vector<16x8xbf16>
    %40 = arith.truncf %34 : vector<16x8xf32> to vector<16x8xbf16>
    %cst_23 = arith.constant dense<0.000000e+00> : vector<16x16xf32>
    %41 = tpu.matmul %39, %40, %cst_23 {dimension_numbers = #tpu.dot_dimension_numbers<[1], [1], [0], [0], [0, 0, 1, 0], [], []>} : vector<16x8xbf16>, vector<16x8xbf16>, vector<16x16xf32> -> vector<16x16xf32>
    %42 = vector.broadcast %1 : vector<1x16xf32> to vector<16x16xf32>
    %43 = arith.addf %41, %42 : vector<16x16xf32>
    %cst_24 = arith.constant dense<0xFF800000> : vector<16xf32>
    %44 = vector.multi_reduction <maximumf>, %43, %cst_24 [1] : vector<16x16xf32> to vector<16xf32>
    %45 = vector.shape_cast %44 : vector<16xf32> to vector<16x1xf32>
    %46 = vector.broadcast %45 : vector<16x1xf32> to vector<16x16xf32>
    %47 = arith.subf %43, %46 : vector<16x16xf32>
    %48 = math.exp %47 : vector<16x16xf32>
    %cst_25 = arith.constant dense<0.000000e+00> : vector<16xf32>
    %49 = vector.multi_reduction <add>, %48, %cst_25 [1] : vector<16x16xf32> to vector<16xf32>
    %50 = vector.shape_cast %49 : vector<16xf32> to vector<16x1xf32>
    %51 = tpu.reciprocal %50 {approx = true} : vector<16x1xf32> -> vector<16x1xf32>
    %52 = vector.broadcast %51 : vector<16x1xf32> to vector<16x16xf32>
    %53 = arith.mulf %48, %52 : vector<16x16xf32>
    %54 = arith.truncf %53 : vector<16x16xf32> to vector<16x16xbf16>
    %55 = arith.truncf %36 : vector<16x8xf32> to vector<16x8xbf16>
    %cst_26 = arith.constant dense<0.000000e+00> : vector<16x8xf32>
    %56 = tpu.matmul %54, %55, %cst_26 {dimension_numbers = #tpu.dot_dimension_numbers<[1], [0], [0], [1], [0, 0, 1, 1], [], []>} : vector<16x16xbf16>, vector<16x8xbf16>, vector<16x8xf32> -> vector<16x8xf32>
    %c0_27 = arith.constant 0 : index
    %c0_28 = arith.constant 0 : index
    %c8_29 = arith.constant 8 : index
    %57 = vector.load %arg3[%c0_27, %c0_28, %c8_29] : memref<2x16x32xf32, #tpu.memory_space<vmem>>, vector<1x16x8xf32>
    %58 = vector.shape_cast %57 : vector<1x16x8xf32> to vector<16x8xf32>
    %59 = vector.shape_cast %56 : vector<16x8xf32> to vector<1x16x8xf32>
    tpu.vector_store %arg3[%c0_27, %c0_28, %c8_29], %59 {strides = array<i32>} : memref<2x16x32xf32, #tpu.memory_space<vmem>>, vector<1x16x8xf32>,
    %c0_30 = arith.constant 0 : index
    %c0_31 = arith.constant 0 : index
    %c48 = arith.constant 48 : index
    %60 = vector.load %arg1[%c0_30, %c0_31, %c48] : memref<2x16x96xf32, #tpu.memory_space<vmem>>, vector<1x16x8xf32>
    %61 = vector.shape_cast %60 : vector<1x16x8xf32> to vector<16x8xf32>
    %c0_32 = arith.constant 0 : index
    %c0_33 = arith.constant 0 : index
    %c56 = arith.constant 56 : index
    %62 = vector.load %arg1[%c0_32, %c0_33, %c56] : memref<2x16x96xf32, #tpu.memory_space<vmem>>, vector<1x16x8xf32>
    %63 = vector.shape_cast %62 : vector<1x16x8xf32> to vector<16x8xf32>
    %c0_34 = arith.constant 0 : index
    %c0_35 = arith.constant 0 : index
    %c64 = arith.constant 64 : index
    %64 = vector.load %arg1[%c0_34, %c0_35, %c64] : memref<2x16x96xf32, #tpu.memory_space<vmem>>, vector<1x16x8xf32>
    %65 = vector.shape_cast %64 : vector<1x16x8xf32> to vector<16x8xf32>
    %cst_36 = arith.constant 0.353553385 : f32
    %66 = vector.broadcast %cst_36 : f32 to vector<16x8xf32>
    %67 = arith.mulf %61, %66 : vector<16x8xf32>
    %68 = arith.truncf %67 : vector<16x8xf32> to vector<16x8xbf16>
    %69 = arith.truncf %63 : vector<16x8xf32> to vector<16x8xbf16>
    %cst_37 = arith.constant dense<0.000000e+00> : vector<16x16xf32>
    %70 = tpu.matmul %68, %69, %cst_37 {dimension_numbers = #tpu.dot_dimension_numbers<[1], [1], [0], [0], [0, 0, 1, 0], [], []>} : vector<16x8xbf16>, vector<16x8xbf16>, vector<16x16xf32> -> vector<16x16xf32>
    %71 = vector.broadcast %1 : vector<1x16xf32> to vector<16x16xf32>
    %72 = arith.addf %70, %71 : vector<16x16xf32>
    %cst_38 = arith.constant dense<0xFF800000> : vector<16xf32>
    %73 = vector.multi_reduction <maximumf>, %72, %cst_38 [1] : vector<16x16xf32> to vector<16xf32>
    %74 = vector.shape_cast %73 : vector<16xf32> to vector<16x1xf32>
    %75 = vector.broadcast %74 : vector<16x1xf32> to vector<16x16xf32>
    %76 = arith.subf %72, %75 : vector<16x16xf32>
    %77 = math.exp %76 : vector<16x16xf32>
    %cst_39 = arith.constant dense<0.000000e+00> : vector<16xf32>
    %78 = vector.multi_reduction <add>, %77, %cst_39 [1] : vector<16x16xf32> to vector<16xf32>
    %79 = vector.shape_cast %78 : vector<16xf32> to vector<16x1xf32>
    %80 = tpu.reciprocal %79 {approx = true} : vector<16x1xf32> -> vector<16x1xf32>
    %81 = vector.broadcast %80 : vector<16x1xf32> to vector<16x16xf32>
    %82 = arith.mulf %77, %81 : vector<16x16xf32>
    %83 = arith.truncf %82 : vector<16x16xf32> to vector<16x16xbf16>
    %84 = arith.truncf %65 : vector<16x8xf32> to vector<16x8xbf16>
    %cst_40 = arith.constant dense<0.000000e+00> : vector<16x8xf32>
    %85 = tpu.matmul %83, %84, %cst_40 {dimension_numbers = #tpu.dot_dimension_numbers<[1], [0], [0], [1], [0, 0, 1, 1], [], []>} : vector<16x16xbf16>, vector<16x8xbf16>, vector<16x8xf32> -> vector<16x8xf32>
    %c0_41 = arith.constant 0 : index
    %c0_42 = arith.constant 0 : index
    %c16_43 = arith.constant 16 : index
    %86 = vector.load %arg3[%c0_41, %c0_42, %c16_43] : memref<2x16x32xf32, #tpu.memory_space<vmem>>, vector<1x16x8xf32>
    %87 = vector.shape_cast %86 : vector<1x16x8xf32> to vector<16x8xf32>
    %88 = vector.shape_cast %85 : vector<16x8xf32> to vector<1x16x8xf32>
    tpu.vector_store %arg3[%c0_41, %c0_42, %c16_43], %88 {strides = array<i32>} : memref<2x16x32xf32, #tpu.memory_space<vmem>>, vector<1x16x8xf32>,
    %c0_44 = arith.constant 0 : index
    %c0_45 = arith.constant 0 : index
    %c72 = arith.constant 72 : index
    %89 = vector.load %arg1[%c0_44, %c0_45, %c72] : memref<2x16x96xf32, #tpu.memory_space<vmem>>, vector<1x16x8xf32>
    %90 = vector.shape_cast %89 : vector<1x16x8xf32> to vector<16x8xf32>
    %c0_46 = arith.constant 0 : index
    %c0_47 = arith.constant 0 : index
    %c80 = arith.constant 80 : index
    %91 = vector.load %arg1[%c0_46, %c0_47, %c80] : memref<2x16x96xf32, #tpu.memory_space<vmem>>, vector<1x16x8xf32>
    %92 = vector.shape_cast %91 : vector<1x16x8xf32> to vector<16x8xf32>
    %c0_48 = arith.constant 0 : index
    %c0_49 = arith.constant 0 : index
    %c88 = arith.constant 88 : index
    %93 = vector.load %arg1[%c0_48, %c0_49, %c88] : memref<2x16x96xf32, #tpu.memory_space<vmem>>, vector<1x16x8xf32>
    %94 = vector.shape_cast %93 : vector<1x16x8xf32> to vector<16x8xf32>
    %cst_50 = arith.constant 0.353553385 : f32
    %95 = vector.broadcast %cst_50 : f32 to vector<16x8xf32>
    %96 = arith.mulf %90, %95 : vector<16x8xf32>
    %97 = arith.truncf %96 : vector<16x8xf32> to vector<16x8xbf16>
    %98 = arith.truncf %92 : vector<16x8xf32> to vector<16x8xbf16>
    %cst_51 = arith.constant dense<0.000000e+00> : vector<16x16xf32>
    %99 = tpu.matmul %97, %98, %cst_51 {dimension_numbers = #tpu.dot_dimension_numbers<[1], [1], [0], [0], [0, 0, 1, 0], [], []>} : vector<16x8xbf16>, vector<16x8xbf16>, vector<16x16xf32> -> vector<16x16xf32>
    %100 = vector.broadcast %1 : vector<1x16xf32> to vector<16x16xf32>
    %101 = arith.addf %99, %100 : vector<16x16xf32>
    %cst_52 = arith.constant dense<0xFF800000> : vector<16xf32>
    %102 = vector.multi_reduction <maximumf>, %101, %cst_52 [1] : vector<16x16xf32> to vector<16xf32>
    %103 = vector.shape_cast %102 : vector<16xf32> to vector<16x1xf32>
    %104 = vector.broadcast %103 : vector<16x1xf32> to vector<16x16xf32>
    %105 = arith.subf %101, %104 : vector<16x16xf32>
    %106 = math.exp %105 : vector<16x16xf32>
    %cst_53 = arith.constant dense<0.000000e+00> : vector<16xf32>
    %107 = vector.multi_reduction <add>, %106, %cst_53 [1] : vector<16x16xf32> to vector<16xf32>
    %108 = vector.shape_cast %107 : vector<16xf32> to vector<16x1xf32>
    %109 = tpu.reciprocal %108 {approx = true} : vector<16x1xf32> -> vector<16x1xf32>
    %110 = vector.broadcast %109 : vector<16x1xf32> to vector<16x16xf32>
    %111 = arith.mulf %106, %110 : vector<16x16xf32>
    %112 = arith.truncf %111 : vector<16x16xf32> to vector<16x16xbf16>
    %113 = arith.truncf %94 : vector<16x8xf32> to vector<16x8xbf16>
    %cst_54 = arith.constant dense<0.000000e+00> : vector<16x8xf32>
    %114 = tpu.matmul %112, %113, %cst_54 {dimension_numbers = #tpu.dot_dimension_numbers<[1], [0], [0], [1], [0, 0, 1, 1], [], []>} : vector<16x16xbf16>, vector<16x8xbf16>, vector<16x8xf32> -> vector<16x8xf32>
    %c0_55 = arith.constant 0 : index
    %c0_56 = arith.constant 0 : index
    %c24_57 = arith.constant 24 : index
    %115 = vector.load %arg3[%c0_55, %c0_56, %c24_57] : memref<2x16x32xf32, #tpu.memory_space<vmem>>, vector<1x16x8xf32>
    %116 = vector.shape_cast %115 : vector<1x16x8xf32> to vector<16x8xf32>
    %117 = vector.shape_cast %114 : vector<16x8xf32> to vector<1x16x8xf32>
    tpu.vector_store %arg3[%c0_55, %c0_56, %c24_57], %117 {strides = array<i32>} : memref<2x16x32xf32, #tpu.memory_space<vmem>>, vector<1x16x8xf32>,
    %c1 = arith.constant 1 : index
    %c0_58 = arith.constant 0 : index
    %c0_59 = arith.constant 0 : index
    %118 = vector.load %arg2[%c1, %c0_58, %c0_59] : memref<2x1x16xf32, #tpu.memory_space<vmem>>, vector<1x1x16xf32>
    %119 = vector.shape_cast %118 : vector<1x1x16xf32> to vector<1x16xf32>
    %c1_60 = arith.constant 1 : index
    %c0_61 = arith.constant 0 : index
    %c0_62 = arith.constant 0 : index
    %120 = vector.load %arg1[%c1_60, %c0_61, %c0_62] : memref<2x16x96xf32, #tpu.memory_space<vmem>>, vector<1x16x8xf32>
    %121 = vector.shape_cast %120 : vector<1x16x8xf32> to vector<16x8xf32>
    %c1_63 = arith.constant 1 : index
    %c0_64 = arith.constant 0 : index
    %c8_65 = arith.constant 8 : index
    %122 = vector.load %arg1[%c1_63, %c0_64, %c8_65] : memref<2x16x96xf32, #tpu.memory_space<vmem>>, vector<1x16x8xf32>
    %123 = vector.shape_cast %122 : vector<1x16x8xf32> to vector<16x8xf32>
    %c1_66 = arith.constant 1 : index
    %c0_67 = arith.constant 0 : index
    %c16_68 = arith.constant 16 : index
    %124 = vector.load %arg1[%c1_66, %c0_67, %c16_68] : memref<2x16x96xf32, #tpu.memory_space<vmem>>, vector<1x16x8xf32>
    %125 = vector.shape_cast %124 : vector<1x16x8xf32> to vector<16x8xf32>
    %cst_69 = arith.constant 0.353553385 : f32
    %126 = vector.broadcast %cst_69 : f32 to vector<16x8xf32>
    %127 = arith.mulf %121, %126 : vector<16x8xf32>
    %128 = arith.truncf %127 : vector<16x8xf32> to vector<16x8xbf16>
    %129 = arith.truncf %123 : vector<16x8xf32> to vector<16x8xbf16>
    %cst_70 = arith.constant dense<0.000000e+00> : vector<16x16xf32>
    %130 = tpu.matmul %128, %129, %cst_70 {dimension_numbers = #tpu.dot_dimension_numbers<[1], [1], [0], [0], [0, 0, 1, 0], [], []>} : vector<16x8xbf16>, vector<16x8xbf16>, vector<16x16xf32> -> vector<16x16xf32>
    %131 = vector.broadcast %119 : vector<1x16xf32> to vector<16x16xf32>
    %132 = arith.addf %130, %131 : vector<16x16xf32>
    %cst_71 = arith.constant dense<0xFF800000> : vector<16xf32>
    %133 = vector.multi_reduction <maximumf>, %132, %cst_71 [1] : vector<16x16xf32> to vector<16xf32>
    %134 = vector.shape_cast %133 : vector<16xf32> to vector<16x1xf32>
    %135 = vector.broadcast %134 : vector<16x1xf32> to vector<16x16xf32>
    %136 = arith.subf %132, %135 : vector<16x16xf32>
    %137 = math.exp %136 : vector<16x16xf32>
    %cst_72 = arith.constant dense<0.000000e+00> : vector<16xf32>
    %138 = vector.multi_reduction <add>, %137, %cst_72 [1] : vector<16x16xf32> to vector<16xf32>
    %139 = vector.shape_cast %138 : vector<16xf32> to vector<16x1xf32>
    %140 = tpu.reciprocal %139 {approx = true} : vector<16x1xf32> -> vector<16x1xf32>
    %141 = vector.broadcast %140 : vector<16x1xf32> to vector<16x16xf32>
    %142 = arith.mulf %137, %141 : vector<16x16xf32>
    %143 = arith.truncf %142 : vector<16x16xf32> to vector<16x16xbf16>
    %144 = arith.truncf %125 : vector<16x8xf32> to vector<16x8xbf16>
    %cst_73 = arith.constant dense<0.000000e+00> : vector<16x8xf32>
    %145 = tpu.matmul %143, %144, %cst_73 {dimension_numbers = #tpu.dot_dimension_numbers<[1], [0], [0], [1], [0, 0, 1, 1], [], []>} : vector<16x16xbf16>, vector<16x8xbf16>, vector<16x8xf32> -> vector<16x8xf32>
    %c1_74 = arith.constant 1 : index
    %c0_75 = arith.constant 0 : index
    %c0_76 = arith.constant 0 : index
    %146 = vector.load %arg3[%c1_74, %c0_75, %c0_76] : memref<2x16x32xf32, #tpu.memory_space<vmem>>, vector<1x16x8xf32>
    %147 = vector.shape_cast %146 : vector<1x16x8xf32> to vector<16x8xf32>
    %148 = vector.shape_cast %145 : vector<16x8xf32> to vector<1x16x8xf32>
    tpu.vector_store %arg3[%c1_74, %c0_75, %c0_76], %148 {strides = array<i32>} : memref<2x16x32xf32, #tpu.memory_space<vmem>>, vector<1x16x8xf32>,
    %c1_77 = arith.constant 1 : index
    %c0_78 = arith.constant 0 : index
    %c24_79 = arith.constant 24 : index
    %149 = vector.load %arg1[%c1_77, %c0_78, %c24_79] : memref<2x16x96xf32, #tpu.memory_space<vmem>>, vector<1x16x8xf32>
    %150 = vector.shape_cast %149 : vector<1x16x8xf32> to vector<16x8xf32>
    %c1_80 = arith.constant 1 : index
    %c0_81 = arith.constant 0 : index
    %c32_82 = arith.constant 32 : index
    %151 = vector.load %arg1[%c1_80, %c0_81, %c32_82] : memref<2x16x96xf32, #tpu.memory_space<vmem>>, vector<1x16x8xf32>
    %152 = vector.shape_cast %151 : vector<1x16x8xf32> to vector<16x8xf32>
    %c1_83 = arith.constant 1 : index
    %c0_84 = arith.constant 0 : index
    %c40_85 = arith.constant 40 : index
    %153 = vector.load %arg1[%c1_83, %c0_84, %c40_85] : memref<2x16x96xf32, #tpu.memory_space<vmem>>, vector<1x16x8xf32>
    %154 = vector.shape_cast %153 : vector<1x16x8xf32> to vector<16x8xf32>
    %cst_86 = arith.constant 0.353553385 : f32
    %155 = vector.broadcast %cst_86 : f32 to vector<16x8xf32>
    %156 = arith.mulf %150, %155 : vector<16x8xf32>
    %157 = arith.truncf %156 : vector<16x8xf32> to vector<16x8xbf16>
    %158 = arith.truncf %152 : vector<16x8xf32> to vector<16x8xbf16>
    %cst_87 = arith.constant dense<0.000000e+00> : vector<16x16xf32>
    %159 = tpu.matmul %157, %158, %cst_87 {dimension_numbers = #tpu.dot_dimension_numbers<[1], [1], [0], [0], [0, 0, 1, 0], [], []>} : vector<16x8xbf16>, vector<16x8xbf16>, vector<16x16xf32> -> vector<16x16xf32>
    %160 = vector.broadcast %119 : vector<1x16xf32> to vector<16x16xf32>
    %161 = arith.addf %159, %160 : vector<16x16xf32>
    %cst_88 = arith.constant dense<0xFF800000> : vector<16xf32>
    %162 = vector.multi_reduction <maximumf>, %161, %cst_88 [1] : vector<16x16xf32> to vector<16xf32>
    %163 = vector.shape_cast %162 : vector<16xf32> to vector<16x1xf32>
    %164 = vector.broadcast %163 : vector<16x1xf32> to vector<16x16xf32>
    %165 = arith.subf %161, %164 : vector<16x16xf32>
    %166 = math.exp %165 : vector<16x16xf32>
    %cst_89 = arith.constant dense<0.000000e+00> : vector<16xf32>
    %167 = vector.multi_reduction <add>, %166, %cst_89 [1] : vector<16x16xf32> to vector<16xf32>
    %168 = vector.shape_cast %167 : vector<16xf32> to vector<16x1xf32>
    %169 = tpu.reciprocal %168 {approx = true} : vector<16x1xf32> -> vector<16x1xf32>
    %170 = vector.broadcast %169 : vector<16x1xf32> to vector<16x16xf32>
    %171 = arith.mulf %166, %170 : vector<16x16xf32>
    %172 = arith.truncf %171 : vector<16x16xf32> to vector<16x16xbf16>
    %173 = arith.truncf %154 : vector<16x8xf32> to vector<16x8xbf16>
    %cst_90 = arith.constant dense<0.000000e+00> : vector<16x8xf32>
    %174 = tpu.matmul %172, %173, %cst_90 {dimension_numbers = #tpu.dot_dimension_numbers<[1], [0], [0], [1], [0, 0, 1, 1], [], []>} : vector<16x16xbf16>, vector<16x8xbf16>, vector<16x8xf32> -> vector<16x8xf32>
    %c1_91 = arith.constant 1 : index
    %c0_92 = arith.constant 0 : index
    %c8_93 = arith.constant 8 : index
    %175 = vector.load %arg3[%c1_91, %c0_92, %c8_93] : memref<2x16x32xf32, #tpu.memory_space<vmem>>, vector<1x16x8xf32>
    %176 = vector.shape_cast %175 : vector<1x16x8xf32> to vector<16x8xf32>
    %177 = vector.shape_cast %174 : vector<16x8xf32> to vector<1x16x8xf32>
    tpu.vector_store %arg3[%c1_91, %c0_92, %c8_93], %177 {strides = array<i32>} : memref<2x16x32xf32, #tpu.memory_space<vmem>>, vector<1x16x8xf32>,
    %c1_94 = arith.constant 1 : index
    %c0_95 = arith.constant 0 : index
    %c48_96 = arith.constant 48 : index
    %178 = vector.load %arg1[%c1_94, %c0_95, %c48_96] : memref<2x16x96xf32, #tpu.memory_space<vmem>>, vector<1x16x8xf32>
    %179 = vector.shape_cast %178 : vector<1x16x8xf32> to vector<16x8xf32>
    %c1_97 = arith.constant 1 : index
    %c0_98 = arith.constant 0 : index
    %c56_99 = arith.constant 56 : index
    %180 = vector.load %arg1[%c1_97, %c0_98, %c56_99] : memref<2x16x96xf32, #tpu.memory_space<vmem>>, vector<1x16x8xf32>
    %181 = vector.shape_cast %180 : vector<1x16x8xf32> to vector<16x8xf32>
    %c1_100 = arith.constant 1 : index
    %c0_101 = arith.constant 0 : index
    %c64_102 = arith.constant 64 : index
    %182 = vector.load %arg1[%c1_100, %c0_101, %c64_102] : memref<2x16x96xf32, #tpu.memory_space<vmem>>, vector<1x16x8xf32>
    %183 = vector.shape_cast %182 : vector<1x16x8xf32> to vector<16x8xf32>
    %cst_103 = arith.constant 0.353553385 : f32
    %184 = vector.broadcast %cst_103 : f32 to vector<16x8xf32>
    %185 = arith.mulf %179, %184 : vector<16x8xf32>
    %186 = arith.truncf %185 : vector<16x8xf32> to vector<16x8xbf16>
    %187 = arith.truncf %181 : vector<16x8xf32> to vector<16x8xbf16>
    %cst_104 = arith.constant dense<0.000000e+00> : vector<16x16xf32>
    %188 = tpu.matmul %186, %187, %cst_104 {dimension_numbers = #tpu.dot_dimension_numbers<[1], [1], [0], [0], [0, 0, 1, 0], [], []>} : vector<16x8xbf16>, vector<16x8xbf16>, vector<16x16xf32> -> vector<16x16xf32>
    %189 = vector.broadcast %119 : vector<1x16xf32> to vector<16x16xf32>
    %190 = arith.addf %188, %189 : vector<16x16xf32>
    %cst_105 = arith.constant dense<0xFF800000> : vector<16xf32>
    %191 = vector.multi_reduction <maximumf>, %190, %cst_105 [1] : vector<16x16xf32> to vector<16xf32>
    %192 = vector.shape_cast %191 : vector<16xf32> to vector<16x1xf32>
    %193 = vector.broadcast %192 : vector<16x1xf32> to vector<16x16xf32>
    %194 = arith.subf %190, %193 : vector<16x16xf32>
    %195 = math.exp %194 : vector<16x16xf32>
    %cst_106 = arith.constant dense<0.000000e+00> : vector<16xf32>
    %196 = vector.multi_reduction <add>, %195, %cst_106 [1] : vector<16x16xf32> to vector<16xf32>
    %197 = vector.shape_cast %196 : vector<16xf32> to vector<16x1xf32>
    %198 = tpu.reciprocal %197 {approx = true} : vector<16x1xf32> -> vector<16x1xf32>
    %199 = vector.broadcast %198 : vector<16x1xf32> to vector<16x16xf32>
    %200 = arith.mulf %195, %199 : vector<16x16xf32>
    %201 = arith.truncf %200 : vector<16x16xf32> to vector<16x16xbf16>
    %202 = arith.truncf %183 : vector<16x8xf32> to vector<16x8xbf16>
    %cst_107 = arith.constant dense<0.000000e+00> : vector<16x8xf32>
    %203 = tpu.matmul %201, %202, %cst_107 {dimension_numbers = #tpu.dot_dimension_numbers<[1], [0], [0], [1], [0, 0, 1, 1], [], []>} : vector<16x16xbf16>, vector<16x8xbf16>, vector<16x8xf32> -> vector<16x8xf32>
    %c1_108 = arith.constant 1 : index
    %c0_109 = arith.constant 0 : index
    %c16_110 = arith.constant 16 : index
    %204 = vector.load %arg3[%c1_108, %c0_109, %c16_110] : memref<2x16x32xf32, #tpu.memory_space<vmem>>, vector<1x16x8xf32>
    %205 = vector.shape_cast %204 : vector<1x16x8xf32> to vector<16x8xf32>
    %206 = vector.shape_cast %203 : vector<16x8xf32> to vector<1x16x8xf32>
    tpu.vector_store %arg3[%c1_108, %c0_109, %c16_110], %206 {strides = array<i32>} : memref<2x16x32xf32, #tpu.memory_space<vmem>>, vector<1x16x8xf32>,
    %c1_111 = arith.constant 1 : index
    %c0_112 = arith.constant 0 : index
    %c72_113 = arith.constant 72 : index
    %207 = vector.load %arg1[%c1_111, %c0_112, %c72_113] : memref<2x16x96xf32, #tpu.memory_space<vmem>>, vector<1x16x8xf32>
    %208 = vector.shape_cast %207 : vector<1x16x8xf32> to vector<16x8xf32>
    %c1_114 = arith.constant 1 : index
    %c0_115 = arith.constant 0 : index
    %c80_116 = arith.constant 80 : index
    %209 = vector.load %arg1[%c1_114, %c0_115, %c80_116] : memref<2x16x96xf32, #tpu.memory_space<vmem>>, vector<1x16x8xf32>
    %210 = vector.shape_cast %209 : vector<1x16x8xf32> to vector<16x8xf32>
    %c1_117 = arith.constant 1 : index
    %c0_118 = arith.constant 0 : index
    %c88_119 = arith.constant 88 : index
    %211 = vector.load %arg1[%c1_117, %c0_118, %c88_119] : memref<2x16x96xf32, #tpu.memory_space<vmem>>, vector<1x16x8xf32>
    %212 = vector.shape_cast %211 : vector<1x16x8xf32> to vector<16x8xf32>
    %cst_120 = arith.constant 0.353553385 : f32
    %213 = vector.broadcast %cst_120 : f32 to vector<16x8xf32>
    %214 = arith.mulf %208, %213 : vector<16x8xf32>
    %215 = arith.truncf %214 : vector<16x8xf32> to vector<16x8xbf16>
    %216 = arith.truncf %210 : vector<16x8xf32> to vector<16x8xbf16>
    %cst_121 = arith.constant dense<0.000000e+00> : vector<16x16xf32>
    %217 = tpu.matmul %215, %216, %cst_121 {dimension_numbers = #tpu.dot_dimension_numbers<[1], [1], [0], [0], [0, 0, 1, 0], [], []>} : vector<16x8xbf16>, vector<16x8xbf16>, vector<16x16xf32> -> vector<16x16xf32>
    %218 = vector.broadcast %119 : vector<1x16xf32> to vector<16x16xf32>
    %219 = arith.addf %217, %218 : vector<16x16xf32>
    %cst_122 = arith.constant dense<0xFF800000> : vector<16xf32>
    %220 = vector.multi_reduction <maximumf>, %219, %cst_122 [1] : vector<16x16xf32> to vector<16xf32>
    %221 = vector.shape_cast %220 : vector<16xf32> to vector<16x1xf32>
    %222 = vector.broadcast %221 : vector<16x1xf32> to vector<16x16xf32>
    %223 = arith.subf %219, %222 : vector<16x16xf32>
    %224 = math.exp %223 : vector<16x16xf32>
    %cst_123 = arith.constant dense<0.000000e+00> : vector<16xf32>
    %225 = vector.multi_reduction <add>, %224, %cst_123 [1] : vector<16x16xf32> to vector<16xf32>
    %226 = vector.shape_cast %225 : vector<16xf32> to vector<16x1xf32>
    %227 = tpu.reciprocal %226 {approx = true} : vector<16x1xf32> -> vector<16x1xf32>
    %228 = vector.broadcast %227 : vector<16x1xf32> to vector<16x16xf32>
    %229 = arith.mulf %224, %228 : vector<16x16xf32>
    %230 = arith.truncf %229 : vector<16x16xf32> to vector<16x16xbf16>
    %231 = arith.truncf %212 : vector<16x8xf32> to vector<16x8xbf16>
    %cst_124 = arith.constant dense<0.000000e+00> : vector<16x8xf32>
    %232 = tpu.matmul %230, %231, %cst_124 {dimension_numbers = #tpu.dot_dimension_numbers<[1], [0], [0], [1], [0, 0, 1, 1], [], []>} : vector<16x16xbf16>, vector<16x8xbf16>, vector<16x8xf32> -> vector<16x8xf32>
    %c1_125 = arith.constant 1 : index
    %c0_126 = arith.constant 0 : index
    %c24_127 = arith.constant 24 : index
    %233 = vector.load %arg3[%c1_125, %c0_126, %c24_127] : memref<2x16x32xf32, #tpu.memory_space<vmem>>, vector<1x16x8xf32>
    %234 = vector.shape_cast %233 : vector<1x16x8xf32> to vector<16x8xf32>
    %235 = vector.shape_cast %232 : vector<16x8xf32> to vector<1x16x8xf32>
    tpu.vector_store %arg3[%c1_125, %c0_126, %c24_127], %235 {strides = array<i32>} : memref<2x16x32xf32, #tpu.memory_space<vmem>>, vector<1x16x8xf32>,
    return
  }
  func.func @transform_0(%arg0: i32) -> (i32, i32, i32) {
    %c0_i32 = arith.constant 0 : i32
    %c0_i32_0 = arith.constant 0 : i32
    %c0_i32_1 = arith.constant 0 : i32
    return %arg0, %c0_i32, %c0_i32_0 : i32, i32, i32
  }
  func.func @transform_1(%arg0: i32) -> (i32, i32, i32) {
    %c0_i32 = arith.constant 0 : i32
    %c0_i32_0 = arith.constant 0 : i32
    %c0_i32_1 = arith.constant 0 : i32
    return %arg0, %c0_i32, %c0_i32_0 : i32, i32, i32
  }
  func.func @transform_2(%arg0: i32) -> (i32, i32, i32) {
    %c0_i32 = arith.constant 0 : i32
    %c0_i32_0 = arith.constant 0 : i32
    %c0_i32_1 = arith.constant 0 : i32
    return %arg0, %c0_i32, %c0_i32_0 : i32, i32, i32
  }
}

</mosaic_0001>

<llo_original>
// kernel: tpu_custom_call.1
$region0: #{tpu_custom_call.1}
  #allocation0 [shape = 'u32[]', space=smem, size = 0x4, offset = 0x4, fixed_abs, tag = 'smem constant byte address 0x4 - core index']
  #allocation1 [shape = 'u32[144,128]{1,0:T(1,128)}', space=vmem, size = 0x12000, scoped, tag = 'internal scratch']
  %s0 = inlined_call_operand.hbm [shape: f32[4,16,96], index: 0, kind: input, shape index: {}]
  %s1 = inlined_call_operand.hbm [shape: f32[4,1,16], index: 1, kind: input, shape index: {}]
  %s2 = inlined_call_operand.hbm [shape: f32[4,16,32], index: 2, kind: output, shape index: {}]
  %s3 = sld [smem:[#allocation0]]
  $region49: #{tpu_custom_call.1} parent=0
    _
  %s5 = ssub.s32 1, %s3
  %s6 = scalar_select 0, %s5, %s3
  $region1: #{tpu_custom_call.1} parent=0
    #allocation2 [shape = 'u8[32768]{0}', space=vmem, size = 0x8000, scoped, tag = 'input window, operand 0']
    #allocation3 [shape = 's32[2]{0}', space=sflag, size = 0x8, scoped, tag = 'scoped memory for tpu_custom_call.1']
    #allocation4 [shape = 's32[2]{0}', space=sflag, size = 0x8, scoped, tag = 'scoped memory for tpu_custom_call.1']
    #allocation5 [shape = 'u8[2048]{0}', space=vmem, size = 0x800, scoped, tag = 'input window, operand 1']
    #allocation6 [shape = 's32[2]{0}', space=sflag, size = 0x8, scoped, tag = 'scoped memory for tpu_custom_call.1']
    #allocation7 [shape = 'u8[32768]{0}', space=vmem, size = 0x8000, scoped, tag = 'output window, operand 0']
    %7 = vsyncpa [#allocation3], 0
    %s8 = scalar_lea.sflag [#allocation3], 1
    %9 = vsyncpa %s8, 0
    %10 = vsyncpa [#allocation6], 0
    %s11 = scalar_lea.sflag [#allocation6], 1
    %12 = vsyncpa %s11, 0
    %13 = vsyncpa [#allocation4], 0
    %s14 = scalar_lea.sflag [#allocation4], 1
    %15 = vsyncpa %s14, 0
    loop: start=0, step=1, limit=4
    $region2: #{tpu_custom_call.1} parent=1 // loop_pre_header
      _
    $region3: #{tpu_custom_call.1} parent=1 // loop_header
      %s17 = sphi 0, %s21
      %p18 = scmp.ge.s32.totalorder %s17, 4
      %s27 = sphi 0, %s29
      %s30 = sphi 0, %s27
      %s31 = sphi 0, %s30
      %s47 = sphi 0, %s31
      %s53 = sphi 0, %s55
      %s56 = sphi 0, %s53
      %s57 = sphi 0, %s56
      %s73 = sphi 0, %s57
      %s79 = sphi 0, %s81
      %s82 = sphi 0, %s79
      %s83 = sphi 0, %s82
      %s99 = sphi 0, %s83
    $region4: #{tpu_custom_call.1} parent=1 // loop_header_branch
      %20 = sbr.rel (%p18) target = $region8
    $region5: #{tpu_custom_call.1} parent=1 // loop_body
      %s22 = ssub.s32 %s17, 1
      %s23 = ssub.s32 %s17, 2
      %s24 = sadd.s32 %s17, 1
      %s25 = ssub.s32 %s17, %s24
      %p26 = scmp.eq.s32.totalorder %s25, 0
      %s28 = sadd.s32 %s27, 1
      %s29 = scalar_select %p26, %s27, %s28
      %p32 = pneg %p26
      %p33 = scmp.eq.s32.totalorder %s17, 1
      %p34 = por %p32, %p33
      %p35 = scmp.ne.s32.totalorder %s27, %s30
      %p36 = scmp.eq.s32.totalorder %s17, 0
      %p37 = por %p35, %p36
      %p38 = scmp.ne.s32.totalorder %s27, %s30
      %p39 = scmp.eq.s32.totalorder %s22, 1
      %p40 = por %p38, %p39
      %p41 = scmp.ne.s32.totalorder %s30, %s31
      %p42 = scmp.eq.s32.totalorder %s22, 0
      %p43 = por %p41, %p42
      %p44 = scmp.ne.s32.totalorder %s30, %s31
      %p45 = scmp.eq.s32.totalorder %s23, 1
      %p46 = por %p44, %p45
      %p48 = scmp.ne.s32.totalorder %s31, %s47
      %p49 = scmp.eq.s32.totalorder %s23, 0
      %p50 = por %p48, %p49
      %s51 = ssub.s32 %s17, %s24
      %p52 = scmp.eq.s32.totalorder %s51, 0
      %s54 = sadd.s32 %s53, 1
      %s55 = scalar_select %p52, %s53, %s54
      %p58 = pneg %p52
      %p59 = scmp.eq.s32.totalorder %s17, 1
      %p60 = por %p58, %p59
      %p61 = scmp.ne.s32.totalorder %s53, %s56
      %p62 = scmp.eq.s32.totalorder %s17, 0
      %p63 = por %p61, %p62
      %p64 = scmp.ne.s32.totalorder %s53, %s56
      %p65 = scmp.eq.s32.totalorder %s22, 1
      %p66 = por %p64, %p65
      %p67 = scmp.ne.s32.totalorder %s56, %s57
      %p68 = scmp.eq.s32.totalorder %s22, 0
      %p69 = por %p67, %p68
      %p70 = scmp.ne.s32.totalorder %s56, %s57
      %p71 = scmp.eq.s32.totalorder %s23, 1
      %p72 = por %p70, %p71
      %p74 = scmp.ne.s32.totalorder %s57, %s73
      %p75 = scmp.eq.s32.totalorder %s23, 0
      %p76 = por %p74, %p75
      %s77 = ssub.s32 %s17, %s24
      %p78 = scmp.eq.s32.totalorder %s77, 0
      %s80 = sadd.s32 %s79, 1
      %s81 = scalar_select %p78, %s79, %s80
      %p84 = pneg %p78
      %p85 = scmp.eq.s32.totalorder %s17, 1
      %p86 = por %p84, %p85
      %p87 = scmp.ne.s32.totalorder %s79, %s82
      %p88 = scmp.eq.s32.totalorder %s17, 0
      %p89 = por %p87, %p88
      %p90 = scmp.ne.s32.totalorder %s79, %s82
      %p91 = scmp.eq.s32.totalorder %s22, 1
      %p92 = por %p90, %p91
      %p93 = scmp.ne.s32.totalorder %s82, %s83
      %p94 = scmp.eq.s32.totalorder %s22, 0
      %p95 = por %p93, %p94
      %p96 = scmp.ne.s32.totalorder %s82, %s83
      %p97 = scmp.eq.s32.totalorder %s23, 1
      %p98 = por %p96, %p97
      %p100 = scmp.ne.s32.totalorder %s83, %s99
      %p101 = scmp.eq.s32.totalorder %s23, 0
      %p102 = por %p100, %p101
      %p103 = scmp.le.s32.totalorder 1, %s17
      %p104 = scmp.lt.s32.totalorder %s17, 3
      %p105 = pnand %p103, %p104
      %p106 = pneg %p105
      // Predicated region
      $region9: #{tpu_custom_call.1} parent=5 // pred_check
        _
      $region10: #{tpu_custom_call.1} parent=5 // pred_check_branch
        %108 = sbr.rel (%p105) target = $region12
      $region11: #{tpu_custom_call.1} parent=5 // pred_region
        %s109 = ssub.s32 %s17, 1
      $region12: #{tpu_custom_call.1} parent=5 // pred_fallthru
        _
      %p110 = scmp.lt.s32.totalorder %s17, 2
      // Predicated region
      $region13: #{tpu_custom_call.1} parent=5 // pred_check
        %p111 = pneg %p110
      $region14: #{tpu_custom_call.1} parent=5 // pred_check_branch
        %113 = sbr.rel (%p111) target = $region16
      $region15: #{tpu_custom_call.1} parent=5 // pred_region
        // Predicated region
        $region17: #{tpu_custom_call.1} parent=15 // pred_check
          %p114 = pneg %p37
        $region18: #{tpu_custom_call.1} parent=15 // pred_check_branch
          %116 = sbr.rel (%p114) target = $region20
        $region19: #{tpu_custom_call.1} parent=15 // pred_region
          %s117 = sand.u32 %s27, 1
          %s118 = scalar_lea.sflag [#allocation3], %s117
          %s119 = sand.u32 %s27, 1
          %s120 = smul.addr %s119, 32
          %s121 = scalar_lea.vmem [#allocation2], %s120
          %s122 = smul.u32 2, %s17
          %s124 = ssub.s32 512, 512
          %125 = vsyncadd %s118, %s124
          %s126 = smul.addr %s122, 2
          %s127 = smul.addr %s126, 128
          %s128 = scalar_lea.hbm %s0, %s127
          %s129 = sshll.u32 %s121, 4
          %s130 = int_to_ptr.vmem [resolvable:$true] %s129
          %135 = dma.hbm_to_vmem [thread:$0]  %s128, 512, %s130, %s118, 128, 128, 8
        $region20: #{tpu_custom_call.1} parent=15 // pred_fallthru
          _
        // Predicated region
        $region21: #{tpu_custom_call.1} parent=15 // pred_check
          %p136 = pneg %p63
        $region22: #{tpu_custom_call.1} parent=15 // pred_check_branch
          %138 = sbr.rel (%p136) target = $region24
        $region23: #{tpu_custom_call.1} parent=15 // pred_region
          %s139 = sand.u32 %s53, 1
          %s140 = scalar_lea.sflag [#allocation6], %s139
          %s141 = sand.u32 %s53, 1
          %s142 = smul.addr %s141, 2
          %s143 = scalar_lea.vmem [#allocation5], %s142
          %s144 = smul.u32 2, %s17
          %s146 = ssub.s32 32, 32
          %147 = vsyncadd %s140, %s146
          %s148 = smul.addr %s144, 16
          %s149 = scalar_lea.hbm %s1, %s148
          %s150 = sshll.u32 %s143, 4
          %s151 = int_to_ptr.vmem [resolvable:$true] %s150
          %156 = dma.hbm_to_vmem [thread:$0]  %s149, 32, %s151, %s140, 16, 16, 1
        $region24: #{tpu_custom_call.1} parent=15 // pred_fallthru
          _
      $region16: #{tpu_custom_call.1} parent=5 // pred_fallthru
        _
      %p157 = scmp.le.s32.totalorder 1, %s17
      %p158 = scmp.lt.s32.totalorder %s17, 3
      %p159 = pnand %p157, %p158
      %p160 = pneg %p159
      // Predicated region
      $region25: #{tpu_custom_call.1} parent=5 // pred_check
        _
      $region26: #{tpu_custom_call.1} parent=5 // pred_check_branch
        %162 = sbr.rel (%p159) target = $region28
      $region27: #{tpu_custom_call.1} parent=5 // pred_region
        %s163 = ssub.s32 %s17, 1
        %s164 = sand.u32 %s30, 1
        %s165 = scalar_lea.sflag [#allocation3], %s164
        %s166 = sand.u32 %s30, 1
        %s167 = smul.addr %s166, 32
        %s168 = scalar_lea.vmem [#allocation2], %s167
        // Predicated region
        $region29: #{tpu_custom_call.1} parent=27 // pred_check
          %p169 = pneg %p43
        $region30: #{tpu_custom_call.1} parent=27 // pred_check_branch
          %171 = sbr.rel (%p169) target = $region32
        $region31: #{tpu_custom_call.1} parent=27 // pred_region
          %172 = dma.done %s165, 512
        $region32: #{tpu_custom_call.1} parent=27 // pred_fallthru
          _
        %s173 = sand.u32 %s56, 1
        %s174 = scalar_lea.sflag [#allocation6], %s173
        %s175 = sand.u32 %s56, 1
        %s176 = smul.addr %s175, 2
        %s177 = scalar_lea.vmem [#allocation5], %s176
        // Predicated region
        $region33: #{tpu_custom_call.1} parent=27 // pred_check
          %p178 = pneg %p69
        $region34: #{tpu_custom_call.1} parent=27 // pred_check_branch
          %180 = sbr.rel (%p178) target = $region36
        $region35: #{tpu_custom_call.1} parent=27 // pred_region
          %181 = dma.done %s174, 32
        $region36: #{tpu_custom_call.1} parent=27 // pred_fallthru
          _
        %s182 = sand.u32 %s30, 1
        %s183 = scalar_lea.sflag [#allocation3], %s182
        %s184 = sand.u32 %s30, 1
        %s185 = smul.addr %s184, 32
        %s186 = scalar_lea.vmem [#allocation2], %s185
        %p187 = pneg %p43
        %p188 = pneg %p40
        %s189 = sand.u32 %s56, 1
        %s190 = scalar_lea.sflag [#allocation6], %s189
        %s191 = sand.u32 %s56, 1
        %s192 = smul.addr %s191, 2
        %s193 = scalar_lea.vmem [#allocation5], %s192
        %p194 = pneg %p69
        %p195 = pneg %p66
        %p196 = pneg %p95
        %p197 = pneg %p92
        %s198 = sand.u32 %s82, 1
        %s199 = scalar_lea.sflag [#allocation4], %s198
        %s200 = sand.u32 %s82, 1
        %s201 = smul.addr %s200, 32
        %s202 = scalar_lea.vmem [#allocation7], %s201
        %s203 = smul.u32 2, %s22
        %s204 = smul.u32 2, %s22
        %s205 = smul.u32 2, %s22
        %v207 = vld [vmem:[%s177] sm:$0x1]
        %v208 = vld [vmem:[%s168] sm:$0xff]
        %v209 = vld [vmem:[%s168 + $0x8] sm:$0xff]
        %v210 = vmul.f32 %v208, 0.35355338
        %v211 = vmul.f32 %v209, 0.35355338
        %v212 = vpack.c.bf16 %v211, %v210
        %v213 = vpack.c.bf16 %v209, %v208
        %v215 = vlaneseq
        %v216 = vshrl.u32 %v215, 7
        %v217 = vsub.s32 0, %v216
        %v218 = vrot.slane %v207, %v217
        %221 = vrot.lane.b32.xlu0 %v213, 120
        %v222 = vpop.permute.xlu0 %221
        %vm223 = vcmask 64512
        %v225 = vsel %vm223, %v212, 0
        %v228 = vsel %vm223, %v222, 0
        %230 = vmatprep.subr.bf16.mxu0 0
        %231 = vmatpush1.bf16.xpose.msra.mxu0 0
        %232 = vmatprep.subr.bf16.mxu0 0
        %233 = vmatpush1.bf16.xpose.msra.mxu0 0
        %234 = vmatprep.subr.bf16.mxu0 0
        %235 = vmatpush1.bf16.xpose.msra.mxu0 0
        %236 = vmatprep.subr.bf16.mxu0 0
        %237 = vmatpush1.bf16.xpose.msra.mxu0 0
        %238 = vmatprep.subr.bf16.mxu0 0
        %239 = vmatpush1.bf16.xpose.msra.mxu0 0
        %240 = vmatprep.subr.bf16.mxu0 0
        %241 = vmatpush1.bf16.xpose.msra.mxu0 0
        %242 = vmatprep.subr.bf16.mxu0 0
        %243 = vmatpush1.bf16.xpose.msra.mxu0 0
        %244 = vmatprep.subr.bf16.mxu0 0
        %245 = vmatpush1.bf16.xpose.msra.mxu0 %v228
        %246 = vmatprep.subr.bf16.mxu0 0
        %247 = vmatpush2.bf16.xpose.msra.mxu0 0
        %248 = vmatprep.subr.bf16.mxu0 0
        %249 = vmatpush2.bf16.xpose.msra.mxu0 0
        %250 = vmatprep.subr.bf16.mxu0 0
        %251 = vmatpush2.bf16.xpose.msra.mxu0 0
        %252 = vmatprep.subr.bf16.mxu0 0
        %253 = vmatpush2.bf16.xpose.msra.mxu0 0
        %254 = vmatprep.subr.bf16.mxu0 0
        %255 = vmatpush2.bf16.xpose.msra.mxu0 0
        %256 = vmatprep.subr.bf16.mxu0 0
        %257 = vmatpush2.bf16.xpose.msra.mxu0 0
        %258 = vmatprep.subr.bf16.mxu0 0
        %259 = vmatpush2.bf16.xpose.msra.mxu0 0
        %260 = vmatprep.subr.bf16.mxu0 0
        %261 = vmatpush2.bf16.xpose.msra.mxu0 0
        %262 = vmatprep.mubr.bf16.mxu0 0
        %263 = vmatmul.mubr.bf16.gmra.mxu0 %v225
        %v264 = vpop.f32.mrf.mxu0
        %v265 = vadd.f32 %v218, %v264
        %v266 = vpop.f32.mrf.mxu0
        %v267 = vpop.f32.mrf.mxu0
        %v268 = vadd.f32 %v218, %v267
        %v269 = vpop.f32.mrf.mxu0
        %270 = vdwg.mxu0
        %vm271 = vcmask 130048
        %v272 = vsel %vm271, %v265, -inf
        %273 = vmax.xlane.f32.xlu0 %v272
        %v274 = vpop.xlane.xlu0 %273
        %v275 = vsel %vm271, %v268, -inf
        %276 = vmax.xlane.f32.xlu0 %v275
        %v277 = vpop.xlane.xlu0 %276
        %v278 = vsub.f32 %v265, %v274
        %v279 = vsub.f32 %v268, %v277
        %v280 = vmul.f32 %v278, 1.442695
        %v281 = vpow.pop %v280
        %v282 = vmul.f32 %v279, 1.442695
        %v283 = vpow.pop %v282
        %v284 = vsel %vm271, %v281, 0.0
        %285 = vadd.xlane.f32.xlu0 %v284
        %v286 = vpop.xlane.xlu0 %285
        %v287 = vsel %vm271, %v283, 0.0
        %288 = vadd.xlane.f32.xlu0 %v287
        %v289 = vpop.xlane.xlu0 %288
        %v290 = vrcp.pop %v286
        %v291 = vrcp.pop %v289
        %v292 = vmul.f32 %v281, %v290
        %v293 = vmul.f32 %v283, %v291
        %v294 = vpack.c.bf16 %v293, %v292
        %295 = vrot.lane.b32.xlu0 %v213, 112
        %v296 = vpop.permute.xlu0 %295
        %v299 = vsel %vm271, %v294, 0
        %301 = vmatprep.subr.bf16.mxu0 0
        %302 = vmatpush1.bf16.msra.mxu0 0
        %303 = vmatprep.subr.bf16.mxu0 0
        %304 = vmatpush1.bf16.msra.mxu0 0
        %305 = vmatprep.subr.bf16.mxu0 0
        %306 = vmatpush1.bf16.msra.mxu0 0
        %307 = vmatprep.subr.bf16.mxu0 0
        %308 = vmatpush1.bf16.msra.mxu0 0
        %309 = vmatprep.subr.bf16.mxu0 0
        %310 = vmatpush1.bf16.msra.mxu0 0
        %311 = vmatprep.subr.bf16.mxu0 0
        %312 = vmatpush1.bf16.msra.mxu0 0
        %313 = vmatprep.subr.bf16.mxu0 0
        %314 = vmatpush1.bf16.msra.mxu0 0
        %315 = vmatprep.subr.bf16.mxu0 0
        %316 = vmatpush1.bf16.msra.mxu0 %v296
        %317 = vmatprep.subr.bf16.mxu0 0
        %318 = vmatpush2.bf16.msra.mxu0 0
        %319 = vmatprep.subr.bf16.mxu0 0
        %320 = vmatpush2.bf16.msra.mxu0 0
        %321 = vmatprep.subr.bf16.mxu0 0
        %322 = vmatpush2.bf16.msra.mxu0 0
        %323 = vmatprep.subr.bf16.mxu0 0
        %324 = vmatpush2.bf16.msra.mxu0 0
        %325 = vmatprep.subr.bf16.mxu0 0
        %326 = vmatpush2.bf16.msra.mxu0 0
        %327 = vmatprep.subr.bf16.mxu0 0
        %328 = vmatpush2.bf16.msra.mxu0 0
        %329 = vmatprep.subr.bf16.mxu0 0
        %330 = vmatpush2.bf16.msra.mxu0 0
        %331 = vmatprep.subr.bf16.mxu0 0
        %332 = vmatpush2.bf16.msra.mxu0 0
        %333 = vmatprep.mubr.bf16.mxu0 0
        %334 = vmatmul.mubr.bf16.gmra.mxu0 %v299
        %v335 = vpop.f32.mrf.mxu0
        %v336 = vadd.f32 0.0, %v335
        %v337 = vpop.f32.mrf.mxu0
        %v338 = vpop.f32.mrf.mxu0
        %v339 = vadd.f32 0.0, %v338
        %v340 = vpop.f32.mrf.mxu0
        %341 = vdwg.mxu0
        %342 = vst.msk [vmem:[%s202] sm:$0xff] %vm223, %v336
        %343 = vst.msk [vmem:[%s202 + $0x8] sm:$0xff] %vm223, %v339
        %v344 = vld [vmem:[%s168] sm:$0xff]
        %v345 = vld [vmem:[%s168 + $0x8] sm:$0xff]
        %v346 = vmul.f32 %v344, 0.35355338
        %v347 = vmul.f32 %v345, 0.35355338
        %v348 = vpack.c.bf16 %v347, %v346
        %v349 = vpack.c.bf16 %v345, %v344
        %351 = vrot.lane.b32.xlu0 %v348, 104
        %v352 = vpop.permute.xlu0 %351
        %354 = vrot.lane.b32.xlu0 %v349, 96
        %v355 = vpop.permute.xlu0 %354
        %v357 = vsel %vm223, %v352, 0
        %v360 = vsel %vm223, %v355, 0
        %362 = vmatprep.subr.bf16.mxu0 0
        %363 = vmatpush1.bf16.xpose.msra.mxu0 0
        %364 = vmatprep.subr.bf16.mxu0 0
        %365 = vmatpush1.bf16.xpose.msra.mxu0 0
        %366 = vmatprep.subr.bf16.mxu0 0
        %367 = vmatpush1.bf16.xpose.msra.mxu0 0
        %368 = vmatprep.subr.bf16.mxu0 0
        %369 = vmatpush1.bf16.xpose.msra.mxu0 0
        %370 = vmatprep.subr.bf16.mxu0 0
        %371 = vmatpush1.bf16.xpose.msra.mxu0 0
        %372 = vmatprep.subr.bf16.mxu0 0
        %373 = vmatpush1.bf16.xpose.msra.mxu0 0
        %374 = vmatprep.subr.bf16.mxu0 0
        %375 = vmatpush1.bf16.xpose.msra.mxu0 0
        %376 = vmatprep.subr.bf16.mxu0 0
        %377 = vmatpush1.bf16.xpose.msra.mxu0 %v360
        %378 = vmatprep.subr.bf16.mxu0 0
        %379 = vmatpush2.bf16.xpose.msra.mxu0 0
        %380 = vmatprep.subr.bf16.mxu0 0
        %381 = vmatpush2.bf16.xpose.msra.mxu0 0
        %382 = vmatprep.subr.bf16.mxu0 0
        %383 = vmatpush2.bf16.xpose.msra.mxu0 0
        %384 = vmatprep.subr.bf16.mxu0 0
        %385 = vmatpush2.bf16.xpose.msra.mxu0 0
        %386 = vmatprep.subr.bf16.mxu0 0
        %387 = vmatpush2.bf16.xpose.msra.mxu0 0
        %388 = vmatprep.subr.bf16.mxu0 0
        %389 = vmatpush2.bf16.xpose.msra.mxu0 0
        %390 = vmatprep.subr.bf16.mxu0 0
        %391 = vmatpush2.bf16.xpose.msra.mxu0 0
        %392 = vmatprep.subr.bf16.mxu0 0
        %393 = vmatpush2.bf16.xpose.msra.mxu0 0
        %394 = vmatprep.mubr.bf16.mxu0 0
        %395 = vmatmul.mubr.bf16.gmra.mxu0 %v357
        %v396 = vpop.f32.mrf.mxu0
        %v397 = vadd.f32 %v218, %v396
        %v398 = vpop.f32.mrf.mxu0
        %v399 = vpop.f32.mrf.mxu0
        %v400 = vadd.f32 %v218, %v399
        %v401 = vpop.f32.mrf.mxu0
        %402 = vdwg.mxu0
        %v403 = vsel %vm271, %v397, -inf
        %404 = vmax.xlane.f32.xlu0 %v403
        %v405 = vpop.xlane.xlu0 %404
        %v406 = vsel %vm271, %v400, -inf
        %407 = vmax.xlane.f32.xlu0 %v406
        %v408 = vpop.xlane.xlu0 %407
        %v409 = vsub.f32 %v397, %v405
        %v410 = vsub.f32 %v400, %v408
        %v411 = vmul.f32 %v409, 1.442695
        %v412 = vpow.pop %v411
        %v413 = vmul.f32 %v410, 1.442695
        %v414 = vpow.pop %v413
        %v415 = vsel %vm271, %v412, 0.0
        %416 = vadd.xlane.f32.xlu0 %v415
        %v417 = vpop.xlane.xlu0 %416
        %v418 = vsel %vm271, %v414, 0.0
        %419 = vadd.xlane.f32.xlu0 %v418
        %v420 = vpop.xlane.xlu0 %419
        %v421 = vrcp.pop %v417
        %v422 = vrcp.pop %v420
        %v423 = vmul.f32 %v412, %v421
        %v424 = vmul.f32 %v414, %v422
        %v425 = vpack.c.bf16 %v424, %v423
        %426 = vrot.lane.b32.xlu0 %v349, 88
        %v427 = vpop.permute.xlu0 %426
        %v430 = vsel %vm271, %v425, 0
        %432 = vmatprep.subr.bf16.mxu0 0
        %433 = vmatpush1.bf16.msra.mxu0 0
        %434 = vmatprep.subr.bf16.mxu0 0
        %435 = vmatpush1.bf16.msra.mxu0 0
        %436 = vmatprep.subr.bf16.mxu0 0
        %437 = vmatpush1.bf16.msra.mxu0 0
        %438 = vmatprep.subr.bf16.mxu0 0
        %439 = vmatpush1.bf16.msra.mxu0 0
        %440 = vmatprep.subr.bf16.mxu0 0
        %441 = vmatpush1.bf16.msra.mxu0 0
        %442 = vmatprep.subr.bf16.mxu0 0
        %443 = vmatpush1.bf16.msra.mxu0 0
        %444 = vmatprep.subr.bf16.mxu0 0
        %445 = vmatpush1.bf16.msra.mxu0 0
        %446 = vmatprep.subr.bf16.mxu0 0
        %447 = vmatpush1.bf16.msra.mxu0 %v427
        %448 = vmatprep.subr.bf16.mxu0 0
        %449 = vmatpush2.bf16.msra.mxu0 0
        %450 = vmatprep.subr.bf16.mxu0 0
        %451 = vmatpush2.bf16.msra.mxu0 0
        %452 = vmatprep.subr.bf16.mxu0 0
        %453 = vmatpush2.bf16.msra.mxu0 0
        %454 = vmatprep.subr.bf16.mxu0 0
        %455 = vmatpush2.bf16.msra.mxu0 0
        %456 = vmatprep.subr.bf16.mxu0 0
        %457 = vmatpush2.bf16.msra.mxu0 0
        %458 = vmatprep.subr.bf16.mxu0 0
        %459 = vmatpush2.bf16.msra.mxu0 0
        %460 = vmatprep.subr.bf16.mxu0 0
        %461 = vmatpush2.bf16.msra.mxu0 0
        %462 = vmatprep.subr.bf16.mxu0 0
        %463 = vmatpush2.bf16.msra.mxu0 0
        %464 = vmatprep.mubr.bf16.mxu0 0
        %465 = vmatmul.mubr.bf16.gmra.mxu0 %v430
        %v466 = vpop.f32.mrf.mxu0
        %v467 = vadd.f32 0.0, %v466
        %v468 = vpop.f32.mrf.mxu0
        %v469 = vpop.f32.mrf.mxu0
        %v470 = vadd.f32 0.0, %v469
        %v471 = vpop.f32.mrf.mxu0
        %472 = vdwg.mxu0
        %475 = vrot.lane.b32.xlu0 %v467, 8
        %v476 = vpop.permute.xlu0 %475
        %477 = vrot.lane.b32.xlu0 %v470, 8
        %v478 = vpop.permute.xlu0 %477
        %vm481 = vcmask 130112
        %482 = vst.msk [vmem:[%s202] sm:$0xff] %vm481, %v476
        %483 = vst.msk [vmem:[%s202 + $0x8] sm:$0xff] %vm481, %v478
        %v484 = vld [vmem:[%s168] sm:$0xff]
        %v485 = vld [vmem:[%s168 + $0x8] sm:$0xff]
        %v486 = vmul.f32 %v484, 0.35355338
        %v487 = vmul.f32 %v485, 0.35355338
        %v488 = vpack.c.bf16 %v487, %v486
        %v489 = vpack.c.bf16 %v485, %v484
        %491 = vrot.lane.b32.xlu0 %v488, 80
        %v492 = vpop.permute.xlu0 %491
        %494 = vrot.lane.b32.xlu0 %v489, 72
        %v495 = vpop.permute.xlu0 %494
        %v497 = vsel %vm223, %v492, 0
        %v500 = vsel %vm223, %v495, 0
        %502 = vmatprep.subr.bf16.mxu0 0
        %503 = vmatpush1.bf16.xpose.msra.mxu0 0
        %504 = vmatprep.subr.bf16.mxu0 0
        %505 = vmatpush1.bf16.xpose.msra.mxu0 0
        %506 = vmatprep.subr.bf16.mxu0 0
        %507 = vmatpush1.bf16.xpose.msra.mxu0 0
        %508 = vmatprep.subr.bf16.mxu0 0
        %509 = vmatpush1.bf16.xpose.msra.mxu0 0
        %510 = vmatprep.subr.bf16.mxu0 0
        %511 = vmatpush1.bf16.xpose.msra.mxu0 0
        %512 = vmatprep.subr.bf16.mxu0 0
        %513 = vmatpush1.bf16.xpose.msra.mxu0 0
        %514 = vmatprep.subr.bf16.mxu0 0
        %515 = vmatpush1.bf16.xpose.msra.mxu0 0
        %516 = vmatprep.subr.bf16.mxu0 0
        %517 = vmatpush1.bf16.xpose.msra.mxu0 %v500
        %518 = vmatprep.subr.bf16.mxu0 0
        %519 = vmatpush2.bf16.xpose.msra.mxu0 0
        %520 = vmatprep.subr.bf16.mxu0 0
        %521 = vmatpush2.bf16.xpose.msra.mxu0 0
        %522 = vmatprep.subr.bf16.mxu0 0
        %523 = vmatpush2.bf16.xpose.msra.mxu0 0
        %524 = vmatprep.subr.bf16.mxu0 0
        %525 = vmatpush2.bf16.xpose.msra.mxu0 0
        %526 = vmatprep.subr.bf16.mxu0 0
        %527 = vmatpush2.bf16.xpose.msra.mxu0 0
        %528 = vmatprep.subr.bf16.mxu0 0
        %529 = vmatpush2.bf16.xpose.msra.mxu0 0
        %530 = vmatprep.subr.bf16.mxu0 0
        %531 = vmatpush2.bf16.xpose.msra.mxu0 0
        %532 = vmatprep.subr.bf16.mxu0 0
        %533 = vmatpush2.bf16.xpose.msra.mxu0 0
        %534 = vmatprep.mubr.bf16.mxu0 0
        %535 = vmatmul.mubr.bf16.gmra.mxu0 %v497
        %v536 = vpop.f32.mrf.mxu0
        %v537 = vadd.f32 %v218, %v536
        %v538 = vpop.f32.mrf.mxu0
        %v539 = vpop.f32.mrf.mxu0
        %v540 = vadd.f32 %v218, %v539
        %v541 = vpop.f32.mrf.mxu0
        %542 = vdwg.mxu0
        %v543 = vsel %vm271, %v537, -inf
        %544 = vmax.xlane.f32.xlu0 %v543
        %v545 = vpop.xlane.xlu0 %544
        %v546 = vsel %vm271, %v540, -inf
        %547 = vmax.xlane.f32.xlu0 %v546
        %v548 = vpop.xlane.xlu0 %547
        %v549 = vsub.f32 %v537, %v545
        %v550 = vsub.f32 %v540, %v548
        %v551 = vmul.f32 %v549, 1.442695
        %v552 = vpow.pop %v551
        %v553 = vmul.f32 %v550, 1.442695
        %v554 = vpow.pop %v553
        %v555 = vsel %vm271, %v552, 0.0
        %556 = vadd.xlane.f32.xlu0 %v555
        %v557 = vpop.xlane.xlu0 %556
        %v558 = vsel %vm271, %v554, 0.0
        %559 = vadd.xlane.f32.xlu0 %v558
        %v560 = vpop.xlane.xlu0 %559
        %v561 = vrcp.pop %v557
        %v562 = vrcp.pop %v560
        %v563 = vmul.f32 %v552, %v561
        %v564 = vmul.f32 %v554, %v562
        %v565 = vpack.c.bf16 %v564, %v563
        %566 = vrot.lane.b32.xlu0 %v489, 64
        %v567 = vpop.permute.xlu0 %566
        %v570 = vsel %vm271, %v565, 0
        %572 = vmatprep.subr.bf16.mxu0 0
        %573 = vmatpush1.bf16.msra.mxu0 0
        %574 = vmatprep.subr.bf16.mxu0 0
        %575 = vmatpush1.bf16.msra.mxu0 0
        %576 = vmatprep.subr.bf16.mxu0 0
        %577 = vmatpush1.bf16.msra.mxu0 0
        %578 = vmatprep.subr.bf16.mxu0 0
        %579 = vmatpush1.bf16.msra.mxu0 0
        %580 = vmatprep.subr.bf16.mxu0 0
        %581 = vmatpush1.bf16.msra.mxu0 0
        %582 = vmatprep.subr.bf16.mxu0 0
        %583 = vmatpush1.bf16.msra.mxu0 0
        %584 = vmatprep.subr.bf16.mxu0 0
        %585 = vmatpush1.bf16.msra.mxu0 0
        %586 = vmatprep.subr.bf16.mxu0 0
        %587 = vmatpush1.bf16.msra.mxu0 %v567
        %588 = vmatprep.subr.bf16.mxu0 0
        %589 = vmatpush2.bf16.msra.mxu0 0
        %590 = vmatprep.subr.bf16.mxu0 0
        %591 = vmatpush2.bf16.msra.mxu0 0
        %592 = vmatprep.subr.bf16.mxu0 0
        %593 = vmatpush2.bf16.msra.mxu0 0
        %594 = vmatprep.subr.bf16.mxu0 0
        %595 = vmatpush2.bf16.msra.mxu0 0
        %596 = vmatprep.subr.bf16.mxu0 0
        %597 = vmatpush2.bf16.msra.mxu0 0
        %598 = vmatprep.subr.bf16.mxu0 0
        %599 = vmatpush2.bf16.msra.mxu0 0
        %600 = vmatprep.subr.bf16.mxu0 0
        %601 = vmatpush2.bf16.msra.mxu0 0
        %602 = vmatprep.subr.bf16.mxu0 0
        %603 = vmatpush2.bf16.msra.mxu0 0
        %604 = vmatprep.mubr.bf16.mxu0 0
        %605 = vmatmul.mubr.bf16.gmra.mxu0 %v570
        %v606 = vpop.f32.mrf.mxu0
        %v607 = vadd.f32 0.0, %v606
        %v608 = vpop.f32.mrf.mxu0
        %v609 = vpop.f32.mrf.mxu0
        %v610 = vadd.f32 0.0, %v609
        %v611 = vpop.f32.mrf.mxu0
        %612 = vdwg.mxu0
        %615 = vrot.lane.b32.xlu0 %v607, 16
        %v616 = vpop.permute.xlu0 %615
        %617 = vrot.lane.b32.xlu0 %v610, 16
        %v618 = vpop.permute.xlu0 %617
        %vm621 = vcmask 195712
        %622 = vst.msk [vmem:[%s202] sm:$0xff] %vm621, %v616
        %623 = vst.msk [vmem:[%s202 + $0x8] sm:$0xff] %vm621, %v618
        %v624 = vld [vmem:[%s168] sm:$0xff]
        %v625 = vld [vmem:[%s168 + $0x8] sm:$0xff]
        %v626 = vmul.f32 %v624, 0.35355338
        %v627 = vmul.f32 %v625, 0.35355338
        %v628 = vpack.c.bf16 %v627, %v626
        %v629 = vpack.c.bf16 %v625, %v624
        %631 = vrot.lane.b32.xlu0 %v628, 56
        %v632 = vpop.permute.xlu0 %631
        %634 = vrot.lane.b32.xlu0 %v629, 48
        %v635 = vpop.permute.xlu0 %634
        %v637 = vsel %vm223, %v632, 0
        %v640 = vsel %vm223, %v635, 0
        %642 = vmatprep.subr.bf16.mxu0 0
        %643 = vmatpush1.bf16.xpose.msra.mxu0 0
        %644 = vmatprep.subr.bf16.mxu0 0
        %645 = vmatpush1.bf16.xpose.msra.mxu0 0
        %646 = vmatprep.subr.bf16.mxu0 0
        %647 = vmatpush1.bf16.xpose.msra.mxu0 0
        %648 = vmatprep.subr.bf16.mxu0 0
        %649 = vmatpush1.bf16.xpose.msra.mxu0 0
        %650 = vmatprep.subr.bf16.mxu0 0
        %651 = vmatpush1.bf16.xpose.msra.mxu0 0
        %652 = vmatprep.subr.bf16.mxu0 0
        %653 = vmatpush1.bf16.xpose.msra.mxu0 0
        %654 = vmatprep.subr.bf16.mxu0 0
        %655 = vmatpush1.bf16.xpose.msra.mxu0 0
        %656 = vmatprep.subr.bf16.mxu0 0
        %657 = vmatpush1.bf16.xpose.msra.mxu0 %v640
        %658 = vmatprep.subr.bf16.mxu0 0
        %659 = vmatpush2.bf16.xpose.msra.mxu0 0
        %660 = vmatprep.subr.bf16.mxu0 0
        %661 = vmatpush2.bf16.xpose.msra.mxu0 0
        %662 = vmatprep.subr.bf16.mxu0 0
        %663 = vmatpush2.bf16.xpose.msra.mxu0 0
        %664 = vmatprep.subr.bf16.mxu0 0
        %665 = vmatpush2.bf16.xpose.msra.mxu0 0
        %666 = vmatprep.subr.bf16.mxu0 0
        %667 = vmatpush2.bf16.xpose.msra.mxu0 0
        %668 = vmatprep.subr.bf16.mxu0 0
        %669 = vmatpush2.bf16.xpose.msra.mxu0 0
        %670 = vmatprep.subr.bf16.mxu0 0
        %671 = vmatpush2.bf16.xpose.msra.mxu0 0
        %672 = vmatprep.subr.bf16.mxu0 0
        %673 = vmatpush2.bf16.xpose.msra.mxu0 0
        %674 = vmatprep.mubr.bf16.mxu0 0
        %675 = vmatmul.mubr.bf16.gmra.mxu0 %v637
        %v676 = vpop.f32.mrf.mxu0
        %v677 = vadd.f32 %v218, %v676
        %v678 = vpop.f32.mrf.mxu0
        %v679 = vpop.f32.mrf.mxu0
        %v680 = vadd.f32 %v218, %v679
        %v681 = vpop.f32.mrf.mxu0
        %682 = vdwg.mxu0
        %v683 = vsel %vm271, %v677, -inf
        %684 = vmax.xlane.f32.xlu0 %v683
        %v685 = vpop.xlane.xlu0 %684
        %v686 = vsel %vm271, %v680, -inf
        %687 = vmax.xlane.f32.xlu0 %v686
        %v688 = vpop.xlane.xlu0 %687
        %v689 = vsub.f32 %v677, %v685
        %v690 = vsub.f32 %v680, %v688
        %v691 = vmul.f32 %v689, 1.442695
        %v692 = vpow.pop %v691
        %v693 = vmul.f32 %v690, 1.442695
        %v694 = vpow.pop %v693
        %v695 = vsel %vm271, %v692, 0.0
        %696 = vadd.xlane.f32.xlu0 %v695
        %v697 = vpop.xlane.xlu0 %696
        %v698 = vsel %vm271, %v694, 0.0
        %699 = vadd.xlane.f32.xlu0 %v698
        %v700 = vpop.xlane.xlu0 %699
        %v701 = vrcp.pop %v697
        %v702 = vrcp.pop %v700
        %v703 = vmul.f32 %v692, %v701
        %v704 = vmul.f32 %v694, %v702
        %v705 = vpack.c.bf16 %v704, %v703
        %706 = vrot.lane.b32.xlu0 %v629, 40
        %v707 = vpop.permute.xlu0 %706
        %v710 = vsel %vm271, %v705, 0
        %712 = vmatprep.subr.bf16.mxu0 0
        %713 = vmatpush1.bf16.msra.mxu0 0
        %714 = vmatprep.subr.bf16.mxu0 0
        %715 = vmatpush1.bf16.msra.mxu0 0
        %716 = vmatprep.subr.bf16.mxu0 0
        %717 = vmatpush1.bf16.msra.mxu0 0
        %718 = vmatprep.subr.bf16.mxu0 0
        %719 = vmatpush1.bf16.msra.mxu0 0
        %720 = vmatprep.subr.bf16.mxu0 0
        %721 = vmatpush1.bf16.msra.mxu0 0
        %722 = vmatprep.subr.bf16.mxu0 0
        %723 = vmatpush1.bf16.msra.mxu0 0
        %724 = vmatprep.subr.bf16.mxu0 0
        %725 = vmatpush1.bf16.msra.mxu0 0
        %726 = vmatprep.subr.bf16.mxu0 0
        %727 = vmatpush1.bf16.msra.mxu0 %v707
        %728 = vmatprep.subr.bf16.mxu0 0
        %729 = vmatpush2.bf16.msra.mxu0 0
        %730 = vmatprep.subr.bf16.mxu0 0
        %731 = vmatpush2.bf16.msra.mxu0 0
        %732 = vmatprep.subr.bf16.mxu0 0
        %733 = vmatpush2.bf16.msra.mxu0 0
        %734 = vmatprep.subr.bf16.mxu0 0
        %735 = vmatpush2.bf16.msra.mxu0 0
        %736 = vmatprep.subr.bf16.mxu0 0
        %737 = vmatpush2.bf16.msra.mxu0 0
        %738 = vmatprep.subr.bf16.mxu0 0
        %739 = vmatpush2.bf16.msra.mxu0 0
        %740 = vmatprep.subr.bf16.mxu0 0
        %741 = vmatpush2.bf16.msra.mxu0 0
        %742 = vmatprep.subr.bf16.mxu0 0
        %743 = vmatpush2.bf16.msra.mxu0 0
        %744 = vmatprep.mubr.bf16.mxu0 0
        %745 = vmatmul.mubr.bf16.gmra.mxu0 %v710
        %v746 = vpop.f32.mrf.mxu0
        %v747 = vadd.f32 0.0, %v746
        %v748 = vpop.f32.mrf.mxu0
        %v749 = vpop.f32.mrf.mxu0
        %v750 = vadd.f32 0.0, %v749
        %v751 = vpop.f32.mrf.mxu0
        %752 = vdwg.mxu0
        %755 = vrot.lane.b32.xlu0 %v747, 24
        %v756 = vpop.permute.xlu0 %755
        %757 = vrot.lane.b32.xlu0 %v750, 24
        %v758 = vpop.permute.xlu0 %757
        %vm761 = vcmask 261312
        %762 = vst.msk [vmem:[%s202] sm:$0xff] %vm761, %v756
        %763 = vst.msk [vmem:[%s202 + $0x8] sm:$0xff] %vm761, %v758
        %s764 = scalar_lea.vmem %s177, 1 [#allocation5]
        %v765 = vld [vmem:[%s764] sm:$0x1]
        %s766 = scalar_lea.vmem %s168, 16 [#allocation2]
        %v767 = vld [vmem:[%s766] sm:$0xff]
        %v768 = vld [vmem:[%s766 + $0x8] sm:$0xff]
        %v769 = vmul.f32 %v767, 0.35355338
        %v770 = vmul.f32 %v768, 0.35355338
        %v771 = vpack.c.bf16 %v770, %v769
        %v772 = vpack.c.bf16 %v768, %v767
        %v774 = vlaneseq
        %v775 = vshrl.u32 %v774, 7
        %v776 = vsub.s32 0, %v775
        %v777 = vrot.slane %v765, %v776
        %780 = vrot.lane.b32.xlu0 %v772, 120
        %v781 = vpop.permute.xlu0 %780
        %v783 = vsel %vm223, %v771, 0
        %v786 = vsel %vm223, %v781, 0
        %788 = vmatprep.subr.bf16.mxu0 0
        %789 = vmatpush1.bf16.xpose.msra.mxu0 0
        %790 = vmatprep.subr.bf16.mxu0 0
        %791 = vmatpush1.bf16.xpose.msra.mxu0 0
        %792 = vmatprep.subr.bf16.mxu0 0
        %793 = vmatpush1.bf16.xpose.msra.mxu0 0
        %794 = vmatprep.subr.bf16.mxu0 0
        %795 = vmatpush1.bf16.xpose.msra.mxu0 0
        %796 = vmatprep.subr.bf16.mxu0 0
        %797 = vmatpush1.bf16.xpose.msra.mxu0 0
        %798 = vmatprep.subr.bf16.mxu0 0
        %799 = vmatpush1.bf16.xpose.msra.mxu0 0
        %800 = vmatprep.subr.bf16.mxu0 0
        %801 = vmatpush1.bf16.xpose.msra.mxu0 0
        %802 = vmatprep.subr.bf16.mxu0 0
        %803 = vmatpush1.bf16.xpose.msra.mxu0 %v786
        %804 = vmatprep.subr.bf16.mxu0 0
        %805 = vmatpush2.bf16.xpose.msra.mxu0 0
        %806 = vmatprep.subr.bf16.mxu0 0
        %807 = vmatpush2.bf16.xpose.msra.mxu0 0
        %808 = vmatprep.subr.bf16.mxu0 0
        %809 = vmatpush2.bf16.xpose.msra.mxu0 0
        %810 = vmatprep.subr.bf16.mxu0 0
        %811 = vmatpush2.bf16.xpose.msra.mxu0 0
        %812 = vmatprep.subr.bf16.mxu0 0
        %813 = vmatpush2.bf16.xpose.msra.mxu0 0
        %814 = vmatprep.subr.bf16.mxu0 0
        %815 = vmatpush2.bf16.xpose.msra.mxu0 0
        %816 = vmatprep.subr.bf16.mxu0 0
        %817 = vmatpush2.bf16.xpose.msra.mxu0 0
        %818 = vmatprep.subr.bf16.mxu0 0
        %819 = vmatpush2.bf16.xpose.msra.mxu0 0
        %820 = vmatprep.mubr.bf16.mxu0 0
        %821 = vmatmul.mubr.bf16.gmra.mxu0 %v783
        %v822 = vpop.f32.mrf.mxu0
        %v823 = vadd.f32 %v777, %v822
        %v824 = vpop.f32.mrf.mxu0
        %v825 = vpop.f32.mrf.mxu0
        %v826 = vadd.f32 %v777, %v825
        %v827 = vpop.f32.mrf.mxu0
        %828 = vdwg.mxu0
        %v829 = vsel %vm271, %v823, -inf
        %830 = vmax.xlane.f32.xlu0 %v829
        %v831 = vpop.xlane.xlu0 %830
        %v832 = vsel %vm271, %v826, -inf
        %833 = vmax.xlane.f32.xlu0 %v832
        %v834 = vpop.xlane.xlu0 %833
        %v835 = vsub.f32 %v823, %v831
        %v836 = vsub.f32 %v826, %v834
        %v837 = vmul.f32 %v835, 1.442695
        %v838 = vpow.pop %v837
        %v839 = vmul.f32 %v836, 1.442695
        %v840 = vpow.pop %v839
        %v841 = vsel %vm271, %v838, 0.0
        %842 = vadd.xlane.f32.xlu0 %v841
        %v843 = vpop.xlane.xlu0 %842
        %v844 = vsel %vm271, %v840, 0.0
        %845 = vadd.xlane.f32.xlu0 %v844
        %v846 = vpop.xlane.xlu0 %845
        %v847 = vrcp.pop %v843
        %v848 = vrcp.pop %v846
        %v849 = vmul.f32 %v838, %v847
        %v850 = vmul.f32 %v840, %v848
        %v851 = vpack.c.bf16 %v850, %v849
        %852 = vrot.lane.b32.xlu0 %v772, 112
        %v853 = vpop.permute.xlu0 %852
        %v856 = vsel %vm271, %v851, 0
        %858 = vmatprep.subr.bf16.mxu0 0
        %859 = vmatpush1.bf16.msra.mxu0 0
        %860 = vmatprep.subr.bf16.mxu0 0
        %861 = vmatpush1.bf16.msra.mxu0 0
        %862 = vmatprep.subr.bf16.mxu0 0
        %863 = vmatpush1.bf16.msra.mxu0 0
        %864 = vmatprep.subr.bf16.mxu0 0
        %865 = vmatpush1.bf16.msra.mxu0 0
        %866 = vmatprep.subr.bf16.mxu0 0
        %867 = vmatpush1.bf16.msra.mxu0 0
        %868 = vmatprep.subr.bf16.mxu0 0
        %869 = vmatpush1.bf16.msra.mxu0 0
        %870 = vmatprep.subr.bf16.mxu0 0
        %871 = vmatpush1.bf16.msra.mxu0 0
        %872 = vmatprep.subr.bf16.mxu0 0
        %873 = vmatpush1.bf16.msra.mxu0 %v853
        %874 = vmatprep.subr.bf16.mxu0 0
        %875 = vmatpush2.bf16.msra.mxu0 0
        %876 = vmatprep.subr.bf16.mxu0 0
        %877 = vmatpush2.bf16.msra.mxu0 0
        %878 = vmatprep.subr.bf16.mxu0 0
        %879 = vmatpush2.bf16.msra.mxu0 0
        %880 = vmatprep.subr.bf16.mxu0 0
        %881 = vmatpush2.bf16.msra.mxu0 0
        %882 = vmatprep.subr.bf16.mxu0 0
        %883 = vmatpush2.bf16.msra.mxu0 0
        %884 = vmatprep.subr.bf16.mxu0 0
        %885 = vmatpush2.bf16.msra.mxu0 0
        %886 = vmatprep.subr.bf16.mxu0 0
        %887 = vmatpush2.bf16.msra.mxu0 0
        %888 = vmatprep.subr.bf16.mxu0 0
        %889 = vmatpush2.bf16.msra.mxu0 0
        %890 = vmatprep.mubr.bf16.mxu0 0
        %891 = vmatmul.mubr.bf16.gmra.mxu0 %v856
        %v892 = vpop.f32.mrf.mxu0
        %v893 = vadd.f32 0.0, %v892
        %v894 = vpop.f32.mrf.mxu0
        %v895 = vpop.f32.mrf.mxu0
        %v896 = vadd.f32 0.0, %v895
        %v897 = vpop.f32.mrf.mxu0
        %898 = vdwg.mxu0
        %s899 = scalar_lea.vmem %s202, 16 [#allocation7]
        %900 = vst.msk [vmem:[%s899] sm:$0xff] %vm223, %v893
        %901 = vst.msk [vmem:[%s899 + $0x8] sm:$0xff] %vm223, %v896
        %v902 = vld [vmem:[%s766] sm:$0xff]
        %v903 = vld [vmem:[%s766 + $0x8] sm:$0xff]
        %v904 = vmul.f32 %v902, 0.35355338
        %v905 = vmul.f32 %v903, 0.35355338
        %v906 = vpack.c.bf16 %v905, %v904
        %v907 = vpack.c.bf16 %v903, %v902
        %909 = vrot.lane.b32.xlu0 %v906, 104
        %v910 = vpop.permute.xlu0 %909
        %912 = vrot.lane.b32.xlu0 %v907, 96
        %v913 = vpop.permute.xlu0 %912
        %v915 = vsel %vm223, %v910, 0
        %v918 = vsel %vm223, %v913, 0
        %920 = vmatprep.subr.bf16.mxu0 0
        %921 = vmatpush1.bf16.xpose.msra.mxu0 0
        %922 = vmatprep.subr.bf16.mxu0 0
        %923 = vmatpush1.bf16.xpose.msra.mxu0 0
        %924 = vmatprep.subr.bf16.mxu0 0
        %925 = vmatpush1.bf16.xpose.msra.mxu0 0
        %926 = vmatprep.subr.bf16.mxu0 0
        %927 = vmatpush1.bf16.xpose.msra.mxu0 0
        %928 = vmatprep.subr.bf16.mxu0 0
        %929 = vmatpush1.bf16.xpose.msra.mxu0 0
        %930 = vmatprep.subr.bf16.mxu0 0
        %931 = vmatpush1.bf16.xpose.msra.mxu0 0
        %932 = vmatprep.subr.bf16.mxu0 0
        %933 = vmatpush1.bf16.xpose.msra.mxu0 0
        %934 = vmatprep.subr.bf16.mxu0 0
        %935 = vmatpush1.bf16.xpose.msra.mxu0 %v918
        %936 = vmatprep.subr.bf16.mxu0 0
        %937 = vmatpush2.bf16.xpose.msra.mxu0 0
        %938 = vmatprep.subr.bf16.mxu0 0
        %939 = vmatpush2.bf16.xpose.msra.mxu0 0
        %940 = vmatprep.subr.bf16.mxu0 0
        %941 = vmatpush2.bf16.xpose.msra.mxu0 0
        %942 = vmatprep.subr.bf16.mxu0 0
        %943 = vmatpush2.bf16.xpose.msra.mxu0 0
        %944 = vmatprep.subr.bf16.mxu0 0
        %945 = vmatpush2.bf16.xpose.msra.mxu0 0
        %946 = vmatprep.subr.bf16.mxu0 0
        %947 = vmatpush2.bf16.xpose.msra.mxu0 0
        %948 = vmatprep.subr.bf16.mxu0 0
        %949 = vmatpush2.bf16.xpose.msra.mxu0 0
        %950 = vmatprep.subr.bf16.mxu0 0
        %951 = vmatpush2.bf16.xpose.msra.mxu0 0
        %952 = vmatprep.mubr.bf16.mxu0 0
        %953 = vmatmul.mubr.bf16.gmra.mxu0 %v915
        %v954 = vpop.f32.mrf.mxu0
        %v955 = vadd.f32 %v777, %v954
        %v956 = vpop.f32.mrf.mxu0
        %v957 = vpop.f32.mrf.mxu0
        %v958 = vadd.f32 %v777, %v957
        %v959 = vpop.f32.mrf.mxu0
        %960 = vdwg.mxu0
        %v961 = vsel %vm271, %v955, -inf
        %962 = vmax.xlane.f32.xlu0 %v961
        %v963 = vpop.xlane.xlu0 %962
        %v964 = vsel %vm271, %v958, -inf
        %965 = vmax.xlane.f32.xlu0 %v964
        %v966 = vpop.xlane.xlu0 %965
        %v967 = vsub.f32 %v955, %v963
        %v968 = vsub.f32 %v958, %v966
        %v969 = vmul.f32 %v967, 1.442695
        %v970 = vpow.pop %v969
        %v971 = vmul.f32 %v968, 1.442695
        %v972 = vpow.pop %v971
        %v973 = vsel %vm271, %v970, 0.0
        %974 = vadd.xlane.f32.xlu0 %v973
        %v975 = vpop.xlane.xlu0 %974
        %v976 = vsel %vm271, %v972, 0.0
        %977 = vadd.xlane.f32.xlu0 %v976
        %v978 = vpop.xlane.xlu0 %977
        %v979 = vrcp.pop %v975
        %v980 = vrcp.pop %v978
        %v981 = vmul.f32 %v970, %v979
        %v982 = vmul.f32 %v972, %v980
        %v983 = vpack.c.bf16 %v982, %v981
        %984 = vrot.lane.b32.xlu0 %v907, 88
        %v985 = vpop.permute.xlu0 %984
        %v988 = vsel %vm271, %v983, 0
        %990 = vmatprep.subr.bf16.mxu0 0
        %991 = vmatpush1.bf16.msra.mxu0 0
        %992 = vmatprep.subr.bf16.mxu0 0
        %993 = vmatpush1.bf16.msra.mxu0 0
        %994 = vmatprep.subr.bf16.mxu0 0
        %995 = vmatpush1.bf16.msra.mxu0 0
        %996 = vmatprep.subr.bf16.mxu0 0
        %997 = vmatpush1.bf16.msra.mxu0 0
        %998 = vmatprep.subr.bf16.mxu0 0
        %999 = vmatpush1.bf16.msra.mxu0 0
        %1000 = vmatprep.subr.bf16.mxu0 0
        %1001 = vmatpush1.bf16.msra.mxu0 0
        %1002 = vmatprep.subr.bf16.mxu0 0
        %1003 = vmatpush1.bf16.msra.mxu0 0
        %1004 = vmatprep.subr.bf16.mxu0 0
        %1005 = vmatpush1.bf16.msra.mxu0 %v985
        %1006 = vmatprep.subr.bf16.mxu0 0
        %1007 = vmatpush2.bf16.msra.mxu0 0
        %1008 = vmatprep.subr.bf16.mxu0 0
        %1009 = vmatpush2.bf16.msra.mxu0 0
        %1010 = vmatprep.subr.bf16.mxu0 0
        %1011 = vmatpush2.bf16.msra.mxu0 0
        %1012 = vmatprep.subr.bf16.mxu0 0
        %1013 = vmatpush2.bf16.msra.mxu0 0
        %1014 = vmatprep.subr.bf16.mxu0 0
        %1015 = vmatpush2.bf16.msra.mxu0 0
        %1016 = vmatprep.subr.bf16.mxu0 0
        %1017 = vmatpush2.bf16.msra.mxu0 0
        %1018 = vmatprep.subr.bf16.mxu0 0
        %1019 = vmatpush2.bf16.msra.mxu0 0
        %1020 = vmatprep.subr.bf16.mxu0 0
        %1021 = vmatpush2.bf16.msra.mxu0 0
        %1022 = vmatprep.mubr.bf16.mxu0 0
        %1023 = vmatmul.mubr.bf16.gmra.mxu0 %v988
        %v1024 = vpop.f32.mrf.mxu0
        %v1025 = vadd.f32 0.0, %v1024
        %v1026 = vpop.f32.mrf.mxu0
        %v1027 = vpop.f32.mrf.mxu0
        %v1028 = vadd.f32 0.0, %v1027
        %v1029 = vpop.f32.mrf.mxu0
        %1030 = vdwg.mxu0
        %1033 = vrot.lane.b32.xlu0 %v1025, 8
        %v1034 = vpop.permute.xlu0 %1033
        %1035 = vrot.lane.b32.xlu0 %v1028, 8
        %v1036 = vpop.permute.xlu0 %1035
        %1039 = vst.msk [vmem:[%s899] sm:$0xff] %vm481, %v1034
        %1040 = vst.msk [vmem:[%s899 + $0x8] sm:$0xff] %vm481, %v1036
        %v1041 = vld [vmem:[%s766] sm:$0xff]
        %v1042 = vld [vmem:[%s766 + $0x8] sm:$0xff]
        %v1043 = vmul.f32 %v1041, 0.35355338
        %v1044 = vmul.f32 %v1042, 0.35355338
        %v1045 = vpack.c.bf16 %v1044, %v1043
        %v1046 = vpack.c.bf16 %v1042, %v1041
        %1048 = vrot.lane.b32.xlu0 %v1045, 80
        %v1049 = vpop.permute.xlu0 %1048
        %1051 = vrot.lane.b32.xlu0 %v1046, 72
        %v1052 = vpop.permute.xlu0 %1051
        %v1054 = vsel %vm223, %v1049, 0
        %v1057 = vsel %vm223, %v1052, 0
        %1059 = vmatprep.subr.bf16.mxu0 0
        %1060 = vmatpush1.bf16.xpose.msra.mxu0 0
        %1061 = vmatprep.subr.bf16.mxu0 0
        %1062 = vmatpush1.bf16.xpose.msra.mxu0 0
        %1063 = vmatprep.subr.bf16.mxu0 0
        %1064 = vmatpush1.bf16.xpose.msra.mxu0 0
        %1065 = vmatprep.subr.bf16.mxu0 0
        %1066 = vmatpush1.bf16.xpose.msra.mxu0 0
        %1067 = vmatprep.subr.bf16.mxu0 0
        %1068 = vmatpush1.bf16.xpose.msra.mxu0 0
        %1069 = vmatprep.subr.bf16.mxu0 0
        %1070 = vmatpush1.bf16.xpose.msra.mxu0 0
        %1071 = vmatprep.subr.bf16.mxu0 0
        %1072 = vmatpush1.bf16.xpose.msra.mxu0 0
        %1073 = vmatprep.subr.bf16.mxu0 0
        %1074 = vmatpush1.bf16.xpose.msra.mxu0 %v1057
        %1075 = vmatprep.subr.bf16.mxu0 0
        %1076 = vmatpush2.bf16.xpose.msra.mxu0 0
        %1077 = vmatprep.subr.bf16.mxu0 0
        %1078 = vmatpush2.bf16.xpose.msra.mxu0 0
        %1079 = vmatprep.subr.bf16.mxu0 0
        %1080 = vmatpush2.bf16.xpose.msra.mxu0 0
        %1081 = vmatprep.subr.bf16.mxu0 0
        %1082 = vmatpush2.bf16.xpose.msra.mxu0 0
        %1083 = vmatprep.subr.bf16.mxu0 0
        %1084 = vmatpush2.bf16.xpose.msra.mxu0 0
        %1085 = vmatprep.subr.bf16.mxu0 0
        %1086 = vmatpush2.bf16.xpose.msra.mxu0 0
        %1087 = vmatprep.subr.bf16.mxu0 0
        %1088 = vmatpush2.bf16.xpose.msra.mxu0 0
        %1089 = vmatprep.subr.bf16.mxu0 0
        %1090 = vmatpush2.bf16.xpose.msra.mxu0 0
        %1091 = vmatprep.mubr.bf16.mxu0 0
        %1092 = vmatmul.mubr.bf16.gmra.mxu0 %v1054
        %v1093 = vpop.f32.mrf.mxu0
        %v1094 = vadd.f32 %v777, %v1093
        %v1095 = vpop.f32.mrf.mxu0
        %v1096 = vpop.f32.mrf.mxu0
        %v1097 = vadd.f32 %v777, %v1096
        %v1098 = vpop.f32.mrf.mxu0
        %1099 = vdwg.mxu0
        %v1100 = vsel %vm271, %v1094, -inf
        %1101 = vmax.xlane.f32.xlu0 %v1100
        %v1102 = vpop.xlane.xlu0 %1101
        %v1103 = vsel %vm271, %v1097, -inf
        %1104 = vmax.xlane.f32.xlu0 %v1103
        %v1105 = vpop.xlane.xlu0 %1104
        %v1106 = vsub.f32 %v1094, %v1102
        %v1107 = vsub.f32 %v1097, %v1105
        %v1108 = vmul.f32 %v1106, 1.442695
        %v1109 = vpow.pop %v1108
        %v1110 = vmul.f32 %v1107, 1.442695
        %v1111 = vpow.pop %v1110
        %v1112 = vsel %vm271, %v1109, 0.0
        %1113 = vadd.xlane.f32.xlu0 %v1112
        %v1114 = vpop.xlane.xlu0 %1113
        %v1115 = vsel %vm271, %v1111, 0.0
        %1116 = vadd.xlane.f32.xlu0 %v1115
        %v1117 = vpop.xlane.xlu0 %1116
        %v1118 = vrcp.pop %v1114
        %v1119 = vrcp.pop %v1117
        %v1120 = vmul.f32 %v1109, %v1118
        %v1121 = vmul.f32 %v1111, %v1119
        %v1122 = vpack.c.bf16 %v1121, %v1120
        %1123 = vrot.lane.b32.xlu0 %v1046, 64
        %v1124 = vpop.permute.xlu0 %1123
        %v1127 = vsel %vm271, %v1122, 0
        %1129 = vmatprep.subr.bf16.mxu0 0
        %1130 = vmatpush1.bf16.msra.mxu0 0
        %1131 = vmatprep.subr.bf16.mxu0 0
        %1132 = vmatpush1.bf16.msra.mxu0 0
        %1133 = vmatprep.subr.bf16.mxu0 0
        %1134 = vmatpush1.bf16.msra.mxu0 0
        %1135 = vmatprep.subr.bf16.mxu0 0
        %1136 = vmatpush1.bf16.msra.mxu0 0
        %1137 = vmatprep.subr.bf16.mxu0 0
        %1138 = vmatpush1.bf16.msra.mxu0 0
        %1139 = vmatprep.subr.bf16.mxu0 0
        %1140 = vmatpush1.bf16.msra.mxu0 0
        %1141 = vmatprep.subr.bf16.mxu0 0
        %1142 = vmatpush1.bf16.msra.mxu0 0
        %1143 = vmatprep.subr.bf16.mxu0 0
        %1144 = vmatpush1.bf16.msra.mxu0 %v1124
        %1145 = vmatprep.subr.bf16.mxu0 0
        %1146 = vmatpush2.bf16.msra.mxu0 0
        %1147 = vmatprep.subr.bf16.mxu0 0
        %1148 = vmatpush2.bf16.msra.mxu0 0
        %1149 = vmatprep.subr.bf16.mxu0 0
        %1150 = vmatpush2.bf16.msra.mxu0 0
        %1151 = vmatprep.subr.bf16.mxu0 0
        %1152 = vmatpush2.bf16.msra.mxu0 0
        %1153 = vmatprep.subr.bf16.mxu0 0
        %1154 = vmatpush2.bf16.msra.mxu0 0
        %1155 = vmatprep.subr.bf16.mxu0 0
        %1156 = vmatpush2.bf16.msra.mxu0 0
        %1157 = vmatprep.subr.bf16.mxu0 0
        %1158 = vmatpush2.bf16.msra.mxu0 0
        %1159 = vmatprep.subr.bf16.mxu0 0
        %1160 = vmatpush2.bf16.msra.mxu0 0
        %1161 = vmatprep.mubr.bf16.mxu0 0
        %1162 = vmatmul.mubr.bf16.gmra.mxu0 %v1127
        %v1163 = vpop.f32.mrf.mxu0
        %v1164 = vadd.f32 0.0, %v1163
        %v1165 = vpop.f32.mrf.mxu0
        %v1166 = vpop.f32.mrf.mxu0
        %v1167 = vadd.f32 0.0, %v1166
        %v1168 = vpop.f32.mrf.mxu0
        %1169 = vdwg.mxu0
        %1172 = vrot.lane.b32.xlu0 %v1164, 16
        %v1173 = vpop.permute.xlu0 %1172
        %1174 = vrot.lane.b32.xlu0 %v1167, 16
        %v1175 = vpop.permute.xlu0 %1174
        %1178 = vst.msk [vmem:[%s899] sm:$0xff] %vm621, %v1173
        %1179 = vst.msk [vmem:[%s899 + $0x8] sm:$0xff] %vm621, %v1175
        %v1180 = vld [vmem:[%s766] sm:$0xff]
        %v1181 = vld [vmem:[%s766 + $0x8] sm:$0xff]
        %v1182 = vmul.f32 %v1180, 0.35355338
        %v1183 = vmul.f32 %v1181, 0.35355338
        %v1184 = vpack.c.bf16 %v1183, %v1182
        %v1185 = vpack.c.bf16 %v1181, %v1180
        %1187 = vrot.lane.b32.xlu0 %v1184, 56
        %v1188 = vpop.permute.xlu0 %1187
        %1190 = vrot.lane.b32.xlu0 %v1185, 48
        %v1191 = vpop.permute.xlu0 %1190
        %v1193 = vsel %vm223, %v1188, 0
        %v1196 = vsel %vm223, %v1191, 0
        %1198 = vmatprep.subr.bf16.mxu0 0
        %1199 = vmatpush1.bf16.xpose.msra.mxu0 0
        %1200 = vmatprep.subr.bf16.mxu0 0
        %1201 = vmatpush1.bf16.xpose.msra.mxu0 0
        %1202 = vmatprep.subr.bf16.mxu0 0
        %1203 = vmatpush1.bf16.xpose.msra.mxu0 0
        %1204 = vmatprep.subr.bf16.mxu0 0
        %1205 = vmatpush1.bf16.xpose.msra.mxu0 0
        %1206 = vmatprep.subr.bf16.mxu0 0
        %1207 = vmatpush1.bf16.xpose.msra.mxu0 0
        %1208 = vmatprep.subr.bf16.mxu0 0
        %1209 = vmatpush1.bf16.xpose.msra.mxu0 0
        %1210 = vmatprep.subr.bf16.mxu0 0
        %1211 = vmatpush1.bf16.xpose.msra.mxu0 0
        %1212 = vmatprep.subr.bf16.mxu0 0
        %1213 = vmatpush1.bf16.xpose.msra.mxu0 %v1196
        %1214 = vmatprep.subr.bf16.mxu0 0
        %1215 = vmatpush2.bf16.xpose.msra.mxu0 0
        %1216 = vmatprep.subr.bf16.mxu0 0
        %1217 = vmatpush2.bf16.xpose.msra.mxu0 0
        %1218 = vmatprep.subr.bf16.mxu0 0
        %1219 = vmatpush2.bf16.xpose.msra.mxu0 0
        %1220 = vmatprep.subr.bf16.mxu0 0
        %1221 = vmatpush2.bf16.xpose.msra.mxu0 0
        %1222 = vmatprep.subr.bf16.mxu0 0
        %1223 = vmatpush2.bf16.xpose.msra.mxu0 0
        %1224 = vmatprep.subr.bf16.mxu0 0
        %1225 = vmatpush2.bf16.xpose.msra.mxu0 0
        %1226 = vmatprep.subr.bf16.mxu0 0
        %1227 = vmatpush2.bf16.xpose.msra.mxu0 0
        %1228 = vmatprep.subr.bf16.mxu0 0
        %1229 = vmatpush2.bf16.xpose.msra.mxu0 0
        %1230 = vmatprep.mubr.bf16.mxu0 0
        %1231 = vmatmul.mubr.bf16.gmra.mxu0 %v1193
        %v1232 = vpop.f32.mrf.mxu0
        %v1233 = vadd.f32 %v777, %v1232
        %v1234 = vpop.f32.mrf.mxu0
        %v1235 = vpop.f32.mrf.mxu0
        %v1236 = vadd.f32 %v777, %v1235
        %v1237 = vpop.f32.mrf.mxu0
        %1238 = vdwg.mxu0
        %v1239 = vsel %vm271, %v1233, -inf
        %1240 = vmax.xlane.f32.xlu0 %v1239
        %v1241 = vpop.xlane.xlu0 %1240
        %v1242 = vsel %vm271, %v1236, -inf
        %1243 = vmax.xlane.f32.xlu0 %v1242
        %v1244 = vpop.xlane.xlu0 %1243
        %v1245 = vsub.f32 %v1233, %v1241
        %v1246 = vsub.f32 %v1236, %v1244
        %v1247 = vmul.f32 %v1245, 1.442695
        %v1248 = vpow.pop %v1247
        %v1249 = vmul.f32 %v1246, 1.442695
        %v1250 = vpow.pop %v1249
        %v1251 = vsel %vm271, %v1248, 0.0
        %1252 = vadd.xlane.f32.xlu0 %v1251
        %v1253 = vpop.xlane.xlu0 %1252
        %v1254 = vsel %vm271, %v1250, 0.0
        %1255 = vadd.xlane.f32.xlu0 %v1254
        %v1256 = vpop.xlane.xlu0 %1255
        %v1257 = vrcp.pop %v1253
        %v1258 = vrcp.pop %v1256
        %v1259 = vmul.f32 %v1248, %v1257
        %v1260 = vmul.f32 %v1250, %v1258
        %v1261 = vpack.c.bf16 %v1260, %v1259
        %1262 = vrot.lane.b32.xlu0 %v1185, 40
        %v1263 = vpop.permute.xlu0 %1262
        %v1266 = vsel %vm271, %v1261, 0
        %1268 = vmatprep.subr.bf16.mxu0 0
        %1269 = vmatpush1.bf16.msra.mxu0 0
        %1270 = vmatprep.subr.bf16.mxu0 0
        %1271 = vmatpush1.bf16.msra.mxu0 0
        %1272 = vmatprep.subr.bf16.mxu0 0
        %1273 = vmatpush1.bf16.msra.mxu0 0
        %1274 = vmatprep.subr.bf16.mxu0 0
        %1275 = vmatpush1.bf16.msra.mxu0 0
        %1276 = vmatprep.subr.bf16.mxu0 0
        %1277 = vmatpush1.bf16.msra.mxu0 0
        %1278 = vmatprep.subr.bf16.mxu0 0
        %1279 = vmatpush1.bf16.msra.mxu0 0
        %1280 = vmatprep.subr.bf16.mxu0 0
        %1281 = vmatpush1.bf16.msra.mxu0 0
        %1282 = vmatprep.subr.bf16.mxu0 0
        %1283 = vmatpush1.bf16.msra.mxu0 %v1263
        %1284 = vmatprep.subr.bf16.mxu0 0
        %1285 = vmatpush2.bf16.msra.mxu0 0
        %1286 = vmatprep.subr.bf16.mxu0 0
        %1287 = vmatpush2.bf16.msra.mxu0 0
        %1288 = vmatprep.subr.bf16.mxu0 0
        %1289 = vmatpush2.bf16.msra.mxu0 0
        %1290 = vmatprep.subr.bf16.mxu0 0
        %1291 = vmatpush2.bf16.msra.mxu0 0
        %1292 = vmatprep.subr.bf16.mxu0 0
        %1293 = vmatpush2.bf16.msra.mxu0 0
        %1294 = vmatprep.subr.bf16.mxu0 0
        %1295 = vmatpush2.bf16.msra.mxu0 0
        %1296 = vmatprep.subr.bf16.mxu0 0
        %1297 = vmatpush2.bf16.msra.mxu0 0
        %1298 = vmatprep.subr.bf16.mxu0 0
        %1299 = vmatpush2.bf16.msra.mxu0 0
        %1300 = vmatprep.mubr.bf16.mxu0 0
        %1301 = vmatmul.mubr.bf16.gmra.mxu0 %v1266
        %v1302 = vpop.f32.mrf.mxu0
        %v1303 = vadd.f32 0.0, %v1302
        %v1304 = vpop.f32.mrf.mxu0
        %v1305 = vpop.f32.mrf.mxu0
        %v1306 = vadd.f32 0.0, %v1305
        %v1307 = vpop.f32.mrf.mxu0
        %1308 = vdwg.mxu0
        %1311 = vrot.lane.b32.xlu0 %v1303, 24
        %v1312 = vpop.permute.xlu0 %1311
        %1313 = vrot.lane.b32.xlu0 %v1306, 24
        %v1314 = vpop.permute.xlu0 %1313
        %1317 = vst.msk [vmem:[%s899] sm:$0xff] %vm761, %v1312
        %1318 = vst.msk [vmem:[%s899 + $0x8] sm:$0xff] %vm761, %v1314
        %s1319 = sand.u32 %s82, 1
        %s1320 = scalar_lea.sflag [#allocation4], %s1319
        %s1321 = sand.u32 %s82, 1
        %s1322 = smul.addr %s1321, 32
        %s1323 = scalar_lea.vmem [#allocation7], %s1322
        // Predicated region
        $region37: #{tpu_custom_call.1} parent=27 // pred_check
          %p1324 = pneg %p92
        $region38: #{tpu_custom_call.1} parent=27 // pred_check_branch
          %1326 = sbr.rel (%p1324) target = $region40
        $region39: #{tpu_custom_call.1} parent=27 // pred_region
          %s1327 = smul.u32 2, %s22
          %s1329 = ssub.s32 512, 512
          %1330 = vsyncadd %s1320, %s1329
          %s1331 = smul.addr %s1327, 2
          %s1332 = smul.addr %s1331, 128
          %s1333 = scalar_lea.hbm %s2, %s1332
          %s1334 = sshll.u32 %s1323, 4
          %s1335 = int_to_ptr.vmem [resolvable:$true] %s1334
          %1340 = dma.vmem_to_hbm [thread:$0]  %s1335, 512, %s1333, %s1320, 128, 128, 8
        $region40: #{tpu_custom_call.1} parent=27 // pred_fallthru
          _
      $region28: #{tpu_custom_call.1} parent=5 // pred_fallthru
        _
      %p1341 = scmp.le.s32.totalorder 2, %s17
      // Predicated region
      $region41: #{tpu_custom_call.1} parent=5 // pred_check
        %p1342 = pneg %p1341
      $region42: #{tpu_custom_call.1} parent=5 // pred_check_branch
        %1344 = sbr.rel (%p1342) target = $region44
      $region43: #{tpu_custom_call.1} parent=5 // pred_region
        %s1345 = ssub.s32 %s17, 2
        // Predicated region
        $region45: #{tpu_custom_call.1} parent=43 // pred_check
          %p1346 = pneg %p98
        $region46: #{tpu_custom_call.1} parent=43 // pred_check_branch
          %1348 = sbr.rel (%p1346) target = $region48
        $region47: #{tpu_custom_call.1} parent=43 // pred_region
          %s1349 = sand.u32 %s83, 1
          %s1350 = scalar_lea.sflag [#allocation4], %s1349
          %s1351 = sand.u32 %s83, 1
          %s1352 = smul.addr %s1351, 32
          %s1353 = scalar_lea.vmem [#allocation7], %s1352
          %1354 = dma.done %s1350, 512
        $region48: #{tpu_custom_call.1} parent=43 // pred_fallthru
          _
      $region44: #{tpu_custom_call.1} parent=5 // pred_fallthru
        _
    $region6: #{tpu_custom_call.1} parent=1 // loop_footer
      %s21 = sadd.s32 1, %s17
    $region7: #{tpu_custom_call.1} parent=1 // loop_footer_branch
      %16 = sbr.rel target = $region3
    $region8: #{tpu_custom_call.1} parent=1 // loop_exit
      _
    %1355 = vsyncpa [#allocation3], 1
    %s1356 = scalar_lea.sflag [#allocation3], 1
    %1357 = vsyncpa %s1356, 1
    %1358 = vsyncpa [#allocation6], 1
    %s1359 = scalar_lea.sflag [#allocation6], 1
    %1360 = vsyncpa %s1359, 1
    %1361 = vsyncpa [#allocation4], 1
    %s1362 = scalar_lea.sflag [#allocation4], 1
    %1363 = vsyncpa %s1362, 1

</llo_original>
